<compile_context>
chip_gen: v5e
topology: v5e:2x2
jax: 0.10.0
libtpu: 0.0.40
codegen_flags: <defaults>
</compile_context>

<pallas_src>
import functools

import jax
import jax.numpy as jnp
from jax.experimental import pallas as pl
from jax.experimental.pallas import tpu as pltpu  # noqa: F401  (TPU backend assumed)

CONFIG = dict(
    vocab_size=100,   # synthetic small vocab (bert-base uses 30522)
    hidden=32,        # synthetic small hidden (bert-base uses 768)
    layers=2,         # synthetic small depth (bert-base uses 12)
    heads=4,
    intermediate=64,
    max_pos=16,
    type_vocab=2,
    eps=1e-12,        # BERT LayerNorm eps
)


# ---------------------------------------------------------------------------
# Fused Pallas kernel: embeddings-LN -> L encoder layers -> pooler -> head
# ---------------------------------------------------------------------------
def _bert_kernel(emb_ref, mask_ref,
                 emb_ln_g_ref, emb_ln_b_ref,
                 wq_ref, bq_ref, wk_ref, bk_ref, wv_ref, bv_ref,
                 wo_ref, bo_ref,
                 ln1_g_ref, ln1_b_ref,
                 w1_ref, b1_ref, w2_ref, b2_ref,
                 ln2_g_ref, ln2_b_ref,
                 pool_w_ref, pool_b_ref, subj_w_ref, subj_b_ref,
                 out_ref, *, num_layers, num_heads, eps):
    m, h = emb_ref.shape                 # (B*S, H) activation slab
    b, _, s = mask_ref.shape             # (B, 1, S) float mask
    hd = h // num_heads
    scale = 1.0 / float(hd) ** 0.5

    def ln(x, gamma, beta):              # f32 LayerNorm (+ gamma/beta)
        mu = jnp.mean(x, axis=-1, keepdims=True)
        var = jnp.mean(jnp.square(x - mu), axis=-1, keepdims=True)
        return (x - mu) * jax.lax.rsqrt(var + eps) * gamma + beta

    def mm(x_bf16, w_bf16, bias_f32):    # bf16 MXU inputs, f32 accumulation
        return jnp.dot(x_bf16, w_bf16, preferred_element_type=jnp.float32) + bias_f32

    # HF-style additive attention mask, hoisted out of the layer loop and
    # replicated head-major once: (B, 1, S) -> (nH*B, 1, S).
    add_mask = (1.0 - mask_ref[...]) * -1e9
    add_mask_g = jnp.concatenate([add_mask] * num_heads, axis=0)

    def split_heads(t):
        # (M, H) f32 -> (nH*B, S, hd) bf16, head-major along the batch axis.
        # Head regroup via static slices + axis-0 concat: Mosaic-safe stand-in
        # for the (B, S, nH, hd) multi-batch-dim einsum layout.
        t3 = t.reshape(b, s, h)
        return jnp.concatenate(
            [t3[:, :, i * hd:(i + 1) * hd] for i in range(num_heads)],
            axis=0).astype(jnp.bfloat16)

    # Embedding LayerNorm (no residual).
    x = ln(emb_ref[...], emb_ln_g_ref[...], emb_ln_b_ref[...])      # (M, H) f32

    for l in range(num_layers):
        xb = x.astype(jnp.bfloat16)

        # ---- Q/K/V projections: three (H, H) matmuls sharing x ----
        # (lane-misaligned fused-QKV slicing avoided at H < 128; at bert-base
        #  H=768 a fused (H, 3H) matmul with aligned splits is preferred.)
        qg = split_heads(mm(xb, wq_ref[l], bq_ref[l]))               # (nH*B, S, hd)
        kg = split_heads(mm(xb, wk_ref[l], bk_ref[l]))
        vg = split_heads(mm(xb, wv_ref[l], bv_ref[l]))

        # ---- all-head batched attention: two batched einsums + one softmax ----
        sc = jnp.einsum("gqd,gkd->gqk", qg, kg,
                        preferred_element_type=jnp.float32) * scale  # (nH*B, S, S)
        sc = sc + add_mask_g                                         # bcast over q rows
        sc = sc - jnp.max(sc, axis=-1, keepdims=True)                # f32 softmax
        p = jnp.exp(sc)
        p = p * pl.reciprocal(jnp.sum(p, axis=-1, keepdims=True), approx=True)
        cg = jnp.einsum("gqk,gkd->gqd", p.astype(jnp.bfloat16), vg,
                        preferred_element_type=jnp.float32)          # (nH*B, S, hd)

        # merge heads back to the lane-dense (M, H) activation layout
        ctx = jnp.concatenate(
            [cg[i * b:(i + 1) * b].reshape(m, hd) for i in range(num_heads)],
            axis=-1).astype(jnp.bfloat16)                            # (M, H)

        # ---- attention output projection + residual + LN ----
        attn_out = mm(ctx, wo_ref[l], bo_ref[l])
        x = ln(attn_out + x, ln1_g_ref[l], ln1_b_ref[l])

        # ---- feed-forward + residual + LN ----
        # TODO(synk): HF BERT uses exact (erf) GELU; tanh-approx GELU used here
        # for guaranteed Mosaic EUP lowering.
        ff = jax.nn.gelu(mm(x.astype(jnp.bfloat16), w1_ref[l], b1_ref[l]),
                         approximate=True)
        ff = mm(ff.astype(jnp.bfloat16), w2_ref[l], b2_ref[l])
        x = ln(ff + x, ln2_g_ref[l], ln2_b_ref[l])

    # ---- pooler (tanh on CLS token) + subjectivity head (sigmoid), fused ----
    cls = x.reshape(b, s, h)[:, 0, :]                                # (B, H) CLS rows
    pooled = jnp.tanh(mm(cls.astype(jnp.bfloat16),
                         pool_w_ref[...], pool_b_ref[...]))          # (B, H)
    # 1-unit head as a VPU mul + lane reduce (avoids an N=1 MXU matmul).
    logit = jnp.sum(pooled * subj_w_ref[...], axis=-1, keepdims=True) + subj_b_ref[...]
    out_ref[...] = jax.nn.sigmoid(logit)                             # (B, 1)


# ---------------------------------------------------------------------------
# Deterministic synthetic parameters (BertModel + nn.Linear(H, 1) shapes,
# per-layer stacks; matmul weights stored in bf16, everything else f32)
# ---------------------------------------------------------------------------
def init_params(key, cfg):
    h, it, L = cfg["hidden"], cfg["intermediate"], cfg["layers"]
    keys = iter(jax.random.split(key, 64))

    def nrm(shape):
        return jax.random.normal(next(keys), shape, jnp.float32) * 0.02

    def per_layer(shape):
        return jnp.stack([nrm(shape) for _ in range(L)], axis=0)

    return {
        "word_emb": nrm((cfg["vocab_size"], h)),
        "pos_emb": nrm((cfg["max_pos"], h)),
        "type_emb": nrm((cfg["type_vocab"], h)),
        "emb_ln_g": jnp.ones((1, h), jnp.float32),
        "emb_ln_b": jnp.zeros((1, h), jnp.float32),
        # Separate Q/K/V weights (H < 128 => three matmuls sharing x in-kernel).
        "wq": per_layer((h, h)).astype(jnp.bfloat16),
        "bq": jnp.zeros((L, 1, h), jnp.float32),
        "wk": per_layer((h, h)).astype(jnp.bfloat16),
        "bk": jnp.zeros((L, 1, h), jnp.float32),
        "wv": per_layer((h, h)).astype(jnp.bfloat16),
        "bv": jnp.zeros((L, 1, h), jnp.float32),
        "wo": per_layer((h, h)).astype(jnp.bfloat16),
        "bo": jnp.zeros((L, 1, h), jnp.float32),
        "ln1_g": jnp.ones((L, 1, h), jnp.float32),
        "ln1_b": jnp.zeros((L, 1, h), jnp.float32),
        "w1": per_layer((h, it)).astype(jnp.bfloat16),
        "b1": jnp.zeros((L, 1, it), jnp.float32),
        "w2": per_layer((it, h)).astype(jnp.bfloat16),
        "b2": jnp.zeros((L, 1, h), jnp.float32),
        "ln2_g": jnp.ones((L, 1, h), jnp.float32),
        "ln2_b": jnp.zeros((L, 1, h), jnp.float32),
        "pool_w": nrm((h, h)).astype(jnp.bfloat16),
        "pool_b": jnp.zeros((1, h), jnp.float32),
        "subj_w": nrm((1, h)),                      # row vector for reduce-style head
        "subj_b": jnp.zeros((1, 1), jnp.float32),
    }


# ---------------------------------------------------------------------------
# Forward pass (== Subjectivity_BERT.forward(ids, mask); dropout_prob=0)
# ---------------------------------------------------------------------------
def subjectivity_bert_forward(params, ids, mask, cfg):
    b, s = ids.shape
    h = cfg["hidden"]

    # Plain-JAX glue: embedding gathers (word + position + token_type 0).
    # TODO(synk): at scale, fuse into the kernel via PrefetchScalarGridSpec
    # (ids in SMEM) + pl.Element row-gather BlockSpec on word_emb.
    emb = (jnp.take(params["word_emb"], ids, axis=0)
           + params["pos_emb"][:s][None, :, :]
           + params["type_emb"][0][None, None, :])
    emb = emb.reshape(b * s, h).astype(jnp.float32)
    maskf = mask.astype(jnp.float32).reshape(b, 1, s)

    kernel = functools.partial(
        _bert_kernel,
        num_layers=cfg["layers"], num_heads=cfg["heads"], eps=cfg["eps"])

    return pl.pallas_call(
        kernel,
        out_shape=jax.ShapeDtypeStruct((b, 1), jnp.float32),
    )(emb, maskf,
      params["emb_ln_g"], params["emb_ln_b"],
      params["wq"], params["bq"], params["wk"], params["bk"],
      params["wv"], params["bv"], params["wo"], params["bo"],
      params["ln1_g"], params["ln1_b"],
      params["w1"], params["b1"], params["w2"], params["b2"],
      params["ln2_g"], params["ln2_b"],
      params["pool_w"], params["pool_b"],
      params["subj_w"], params["subj_b"])


if __name__ == "__main__":
    cfg = CONFIG
    key = jax.random.PRNGKey(0)
    kp, ki = jax.random.split(key, 2)
    params = init_params(kp, cfg)

    B, S = 2, 8
    ids = jax.random.randint(ki, (B, S), 0, cfg["vocab_size"], dtype=jnp.int32)
    mask = jnp.ones((B, S), jnp.int32).at[1, 6:].set(0)  # one padded sequence

    fwd = jax.jit(functools.partial(subjectivity_bert_forward, cfg=cfg))
    out = fwd(params, ids, mask)
    jax.block_until_ready(out)
    assert out.shape == (B, 1) and out.dtype == jnp.float32
    print("KERNEL_OK")
</pallas_src>

<mosaic_0001>
module attributes {stable_mosaic.version = 11 : i64} {
  func.func @_bert_kernel(%arg0: memref<16x32xf32, #tpu.memory_space<vmem>>, %arg1: memref<2x1x8xf32, #tpu.memory_space<vmem>>, %arg2: memref<1x32xf32, #tpu.memory_space<vmem>>, %arg3: memref<1x32xf32, #tpu.memory_space<vmem>>, %arg4: memref<2x32x32xbf16, #tpu.memory_space<vmem>>, %arg5: memref<2x1x32xf32, #tpu.memory_space<vmem>>, %arg6: memref<2x32x32xbf16, #tpu.memory_space<vmem>>, %arg7: memref<2x1x32xf32, #tpu.memory_space<vmem>>, %arg8: memref<2x32x32xbf16, #tpu.memory_space<vmem>>, %arg9: memref<2x1x32xf32, #tpu.memory_space<vmem>>, %arg10: memref<2x32x32xbf16, #tpu.memory_space<vmem>>, %arg11: memref<2x1x32xf32, #tpu.memory_space<vmem>>, %arg12: memref<2x1x32xf32, #tpu.memory_space<vmem>>, %arg13: memref<2x1x32xf32, #tpu.memory_space<vmem>>, %arg14: memref<2x32x64xbf16, #tpu.memory_space<vmem>>, %arg15: memref<2x1x64xf32, #tpu.memory_space<vmem>>, %arg16: memref<2x64x32xbf16, #tpu.memory_space<vmem>>, %arg17: memref<2x1x32xf32, #tpu.memory_space<vmem>>, %arg18: memref<2x1x32xf32, #tpu.memory_space<vmem>>, %arg19: memref<2x1x32xf32, #tpu.memory_space<vmem>>, %arg20: memref<32x32xbf16, #tpu.memory_space<vmem>>, %arg21: memref<1x32xf32, #tpu.memory_space<vmem>>, %arg22: memref<1x32xf32, #tpu.memory_space<vmem>>, %arg23: memref<1x1xf32, #tpu.memory_space<vmem>>, %arg24: memref<2x1xf32, #tpu.memory_space<vmem>>) attributes {dimension_semantics = [], scalar_prefetch = 0 : i64, scratch_operands = 0 : i64, tpu.core_type = #tpu.core_type<tc>} {
    %c0 = arith.constant 0 : index
    %c0_0 = arith.constant 0 : index
    %c0_1 = arith.constant 0 : index
    %0 = vector.load %arg1[%c0, %c0_0, %c0_1] : memref<2x1x8xf32, #tpu.memory_space<vmem>>, vector<2x1x8xf32>
    %cst = arith.constant 1.000000e+00 : f32
    %1 = vector.broadcast %cst : f32 to vector<2x1x8xf32>
    %2 = arith.subf %1, %0 : vector<2x1x8xf32>
    %cst_2 = arith.constant -1.000000e+09 : f32
    %3 = vector.broadcast %cst_2 : f32 to vector<2x1x8xf32>
    %4 = arith.mulf %2, %3 : vector<2x1x8xf32>
    %5 = tpu.concatenate %4, %4, %4, %4 in 0 : vector<2x1x8xf32>, vector<2x1x8xf32>, vector<2x1x8xf32>, vector<2x1x8xf32> -> vector<8x1x8xf32>
    %c0_3 = arith.constant 0 : index
    %c0_4 = arith.constant 0 : index
    %6 = vector.load %arg0[%c0_3, %c0_4] : memref<16x32xf32, #tpu.memory_space<vmem>>, vector<16x32xf32>
    %c0_5 = arith.constant 0 : index
    %c0_6 = arith.constant 0 : index
    %7 = vector.load %arg2[%c0_5, %c0_6] : memref<1x32xf32, #tpu.memory_space<vmem>>, vector<1x32xf32>
    %c0_7 = arith.constant 0 : index
    %c0_8 = arith.constant 0 : index
    %8 = vector.load %arg3[%c0_7, %c0_8] : memref<1x32xf32, #tpu.memory_space<vmem>>, vector<1x32xf32>
    %cst_9 = arith.constant dense<0.000000e+00> : vector<16xf32>
    %9 = vector.multi_reduction <add>, %6, %cst_9 [1] : vector<16x32xf32> to vector<16xf32>
    %10 = vector.shape_cast %9 : vector<16xf32> to vector<16x1xf32>
    %cst_10 = arith.constant 3.200000e+01 : f32
    %11 = vector.broadcast %cst_10 : f32 to vector<16x1xf32>
    %12 = arith.divf %10, %11 : vector<16x1xf32>
    %13 = vector.broadcast %12 : vector<16x1xf32> to vector<16x32xf32>
    %14 = arith.subf %6, %13 : vector<16x32xf32>
    %15 = arith.mulf %14, %14 : vector<16x32xf32>
    %cst_11 = arith.constant dense<0.000000e+00> : vector<16xf32>
    %16 = vector.multi_reduction <add>, %15, %cst_11 [1] : vector<16x32xf32> to vector<16xf32>
    %17 = vector.shape_cast %16 : vector<16xf32> to vector<16x1xf32>
    %cst_12 = arith.constant 3.200000e+01 : f32
    %18 = vector.broadcast %cst_12 : f32 to vector<16x1xf32>
    %19 = arith.divf %17, %18 : vector<16x1xf32>
    %20 = vector.broadcast %12 : vector<16x1xf32> to vector<16x32xf32>
    %21 = arith.subf %6, %20 : vector<16x32xf32>
    %cst_13 = arith.constant 9.99999996E-13 : f32
    %22 = vector.broadcast %cst_13 : f32 to vector<16x1xf32>
    %23 = arith.addf %19, %22 : vector<16x1xf32>
    %24 = math.rsqrt %23 : vector<16x1xf32>
    %25 = vector.broadcast %24 : vector<16x1xf32> to vector<16x32xf32>
    %26 = arith.mulf %21, %25 : vector<16x32xf32>
    %27 = vector.broadcast %7 : vector<1x32xf32> to vector<16x32xf32>
    %28 = arith.mulf %26, %27 : vector<16x32xf32>
    %29 = vector.broadcast %8 : vector<1x32xf32> to vector<16x32xf32>
    %30 = arith.addf %28, %29 : vector<16x32xf32>
    %31 = arith.truncf %30 : vector<16x32xf32> to vector<16x32xbf16>
    %c0_14 = arith.constant 0 : index
    %c0_15 = arith.constant 0 : index
    %c0_16 = arith.constant 0 : index
    %32 = vector.load %arg4[%c0_14, %c0_15, %c0_16] : memref<2x32x32xbf16, #tpu.memory_space<vmem>>, vector<1x32x32xbf16>
    %33 = vector.shape_cast %32 : vector<1x32x32xbf16> to vector<32x32xbf16>
    %c0_17 = arith.constant 0 : index
    %c0_18 = arith.constant 0 : index
    %c0_19 = arith.constant 0 : index
    %34 = vector.load %arg5[%c0_17, %c0_18, %c0_19] : memref<2x1x32xf32, #tpu.memory_space<vmem>>, vector<1x1x32xf32>
    %35 = vector.shape_cast %34 : vector<1x1x32xf32> to vector<1x32xf32>
    %cst_20 = arith.constant dense<0.000000e+00> : vector<16x32xf32>
    %36 = tpu.matmul %31, %33, %cst_20 {dimension_numbers = #tpu.dot_dimension_numbers<[1], [0], [0], [1], [0, 0, 1, 1], [], []>} : vector<16x32xbf16>, vector<32x32xbf16>, vector<16x32xf32> -> vector<16x32xf32>
    %37 = vector.broadcast %35 : vector<1x32xf32> to vector<16x32xf32>
    %38 = arith.addf %36, %37 : vector<16x32xf32>
    %39 = vector.shape_cast %38 : vector<16x32xf32> to vector<2x8x32xf32>
    %40 = vector.extract_strided_slice %39 {offsets = [0, 0, 0], sizes = [2, 8, 8], strides = [1, 1, 1]} : vector<2x8x32xf32> to vector<2x8x8xf32>
    %41 = vector.extract_strided_slice %39 {offsets = [0, 0, 8], sizes = [2, 8, 8], strides = [1, 1, 1]} : vector<2x8x32xf32> to vector<2x8x8xf32>
    %42 = vector.extract_strided_slice %39 {offsets = [0, 0, 16], sizes = [2, 8, 8], strides = [1, 1, 1]} : vector<2x8x32xf32> to vector<2x8x8xf32>
    %43 = vector.extract_strided_slice %39 {offsets = [0, 0, 24], sizes = [2, 8, 8], strides = [1, 1, 1]} : vector<2x8x32xf32> to vector<2x8x8xf32>
    %44 = tpu.concatenate %40, %41, %42, %43 in 0 : vector<2x8x8xf32>, vector<2x8x8xf32>, vector<2x8x8xf32>, vector<2x8x8xf32> -> vector<8x8x8xf32>
    %45 = arith.truncf %44 : vector<8x8x8xf32> to vector<8x8x8xbf16>
    %c0_21 = arith.constant 0 : index
    %c0_22 = arith.constant 0 : index
    %c0_23 = arith.constant 0 : index
    %46 = vector.load %arg6[%c0_21, %c0_22, %c0_23] : memref<2x32x32xbf16, #tpu.memory_space<vmem>>, vector<1x32x32xbf16>
    %47 = vector.shape_cast %46 : vector<1x32x32xbf16> to vector<32x32xbf16>
    %c0_24 = arith.constant 0 : index
    %c0_25 = arith.constant 0 : index
    %c0_26 = arith.constant 0 : index
    %48 = vector.load %arg7[%c0_24, %c0_25, %c0_26] : memref<2x1x32xf32, #tpu.memory_space<vmem>>, vector<1x1x32xf32>
    %49 = vector.shape_cast %48 : vector<1x1x32xf32> to vector<1x32xf32>
    %cst_27 = arith.constant dense<0.000000e+00> : vector<16x32xf32>
    %50 = tpu.matmul %31, %47, %cst_27 {dimension_numbers = #tpu.dot_dimension_numbers<[1], [0], [0], [1], [0, 0, 1, 1], [], []>} : vector<16x32xbf16>, vector<32x32xbf16>, vector<16x32xf32> -> vector<16x32xf32>
    %51 = vector.broadcast %49 : vector<1x32xf32> to vector<16x32xf32>
    %52 = arith.addf %50, %51 : vector<16x32xf32>
    %53 = vector.shape_cast %52 : vector<16x32xf32> to vector<2x8x32xf32>
    %54 = vector.extract_strided_slice %53 {offsets = [0, 0, 0], sizes = [2, 8, 8], strides = [1, 1, 1]} : vector<2x8x32xf32> to vector<2x8x8xf32>
    %55 = vector.extract_strided_slice %53 {offsets = [0, 0, 8], sizes = [2, 8, 8], strides = [1, 1, 1]} : vector<2x8x32xf32> to vector<2x8x8xf32>
    %56 = vector.extract_strided_slice %53 {offsets = [0, 0, 16], sizes = [2, 8, 8], strides = [1, 1, 1]} : vector<2x8x32xf32> to vector<2x8x8xf32>
    %57 = vector.extract_strided_slice %53 {offsets = [0, 0, 24], sizes = [2, 8, 8], strides = [1, 1, 1]} : vector<2x8x32xf32> to vector<2x8x8xf32>
    %58 = tpu.concatenate %54, %55, %56, %57 in 0 : vector<2x8x8xf32>, vector<2x8x8xf32>, vector<2x8x8xf32>, vector<2x8x8xf32> -> vector<8x8x8xf32>
    %59 = arith.truncf %58 : vector<8x8x8xf32> to vector<8x8x8xbf16>
    %c0_28 = arith.constant 0 : index
    %c0_29 = arith.constant 0 : index
    %c0_30 = arith.constant 0 : index
    %60 = vector.load %arg8[%c0_28, %c0_29, %c0_30] : memref<2x32x32xbf16, #tpu.memory_space<vmem>>, vector<1x32x32xbf16>
    %61 = vector.shape_cast %60 : vector<1x32x32xbf16> to vector<32x32xbf16>
    %c0_31 = arith.constant 0 : index
    %c0_32 = arith.constant 0 : index
    %c0_33 = arith.constant 0 : index
    %62 = vector.load %arg9[%c0_31, %c0_32, %c0_33] : memref<2x1x32xf32, #tpu.memory_space<vmem>>, vector<1x1x32xf32>
    %63 = vector.shape_cast %62 : vector<1x1x32xf32> to vector<1x32xf32>
    %cst_34 = arith.constant dense<0.000000e+00> : vector<16x32xf32>
    %64 = tpu.matmul %31, %61, %cst_34 {dimension_numbers = #tpu.dot_dimension_numbers<[1], [0], [0], [1], [0, 0, 1, 1], [], []>} : vector<16x32xbf16>, vector<32x32xbf16>, vector<16x32xf32> -> vector<16x32xf32>
    %65 = vector.broadcast %63 : vector<1x32xf32> to vector<16x32xf32>
    %66 = arith.addf %64, %65 : vector<16x32xf32>
    %67 = vector.shape_cast %66 : vector<16x32xf32> to vector<2x8x32xf32>
    %68 = vector.extract_strided_slice %67 {offsets = [0, 0, 0], sizes = [2, 8, 8], strides = [1, 1, 1]} : vector<2x8x32xf32> to vector<2x8x8xf32>
    %69 = vector.extract_strided_slice %67 {offsets = [0, 0, 8], sizes = [2, 8, 8], strides = [1, 1, 1]} : vector<2x8x32xf32> to vector<2x8x8xf32>
    %70 = vector.extract_strided_slice %67 {offsets = [0, 0, 16], sizes = [2, 8, 8], strides = [1, 1, 1]} : vector<2x8x32xf32> to vector<2x8x8xf32>
    %71 = vector.extract_strided_slice %67 {offsets = [0, 0, 24], sizes = [2, 8, 8], strides = [1, 1, 1]} : vector<2x8x32xf32> to vector<2x8x8xf32>
    %72 = tpu.concatenate %68, %69, %70, %71 in 0 : vector<2x8x8xf32>, vector<2x8x8xf32>, vector<2x8x8xf32>, vector<2x8x8xf32> -> vector<8x8x8xf32>
    %73 = arith.truncf %72 : vector<8x8x8xf32> to vector<8x8x8xbf16>
    "tpu.trace_start"() <{level = 10 : i32, message = "gqd,gkd->gqk"}> : () -> ()
    %cst_35 = arith.constant dense<0.000000e+00> : vector<8x8x8xf32>
    %74 = tpu.matmul %45, %59, %cst_35 {dimension_numbers = #tpu.dot_dimension_numbers<[2], [2], [1], [1], [0, 0, 0, 1, 1, 1], [0], [0]>} : vector<8x8x8xbf16>, vector<8x8x8xbf16>, vector<8x8x8xf32> -> vector<8x8x8xf32>
    "tpu.trace_stop"() : () -> ()
    %cst_36 = arith.constant 0.353553385 : f32
    %75 = vector.broadcast %cst_36 : f32 to vector<8x8x8xf32>
    %76 = arith.mulf %74, %75 : vector<8x8x8xf32>
    %77 = vector.broadcast %5 : vector<8x1x8xf32> to vector<8x8x8xf32>
    %78 = arith.addf %76, %77 : vector<8x8x8xf32>
    %cst_37 = arith.constant dense<0xFF800000> : vector<8x8xf32>
    %79 = vector.multi_reduction <maximumf>, %78, %cst_37 [2] : vector<8x8x8xf32> to vector<8x8xf32>
    %80 = vector.shape_cast %79 : vector<8x8xf32> to vector<8x8x1xf32>
    %81 = vector.broadcast %80 : vector<8x8x1xf32> to vector<8x8x8xf32>
    %82 = arith.subf %78, %81 : vector<8x8x8xf32>
    %83 = math.exp %82 : vector<8x8x8xf32>
    %cst_38 = arith.constant dense<0.000000e+00> : vector<8x8xf32>
    %84 = vector.multi_reduction <add>, %83, %cst_38 [2] : vector<8x8x8xf32> to vector<8x8xf32>
    %85 = vector.shape_cast %84 : vector<8x8xf32> to vector<8x8x1xf32>
    %86 = tpu.reciprocal %85 {approx = true} : vector<8x8x1xf32> -> vector<8x8x1xf32>
    %87 = vector.broadcast %86 : vector<8x8x1xf32> to vector<8x8x8xf32>
    %88 = arith.mulf %83, %87 : vector<8x8x8xf32>
    %89 = arith.truncf %88 : vector<8x8x8xf32> to vector<8x8x8xbf16>
    "tpu.trace_start"() <{level = 10 : i32, message = "gqk,gkd->gqd"}> : () -> ()
    %cst_39 = arith.constant dense<0.000000e+00> : vector<8x8x8xf32>
    %90 = tpu.matmul %89, %73, %cst_39 {dimension_numbers = #tpu.dot_dimension_numbers<[2], [1], [1], [2], [0, 0, 0, 1, 1, 2], [0], [0]>} : vector<8x8x8xbf16>, vector<8x8x8xbf16>, vector<8x8x8xf32> -> vector<8x8x8xf32>
    "tpu.trace_stop"() : () -> ()
    %91 = vector.extract_strided_slice %90 {offsets = [0, 0, 0], sizes = [2, 8, 8], strides = [1, 1, 1]} : vector<8x8x8xf32> to vector<2x8x8xf32>
    %92 = vector.shape_cast %91 : vector<2x8x8xf32> to vector<16x8xf32>
    %93 = vector.extract_strided_slice %90 {offsets = [2, 0, 0], sizes = [2, 8, 8], strides = [1, 1, 1]} : vector<8x8x8xf32> to vector<2x8x8xf32>
    %94 = vector.shape_cast %93 : vector<2x8x8xf32> to vector<16x8xf32>
    %95 = vector.extract_strided_slice %90 {offsets = [4, 0, 0], sizes = [2, 8, 8], strides = [1, 1, 1]} : vector<8x8x8xf32> to vector<2x8x8xf32>
    %96 = vector.shape_cast %95 : vector<2x8x8xf32> to vector<16x8xf32>
    %97 = vector.extract_strided_slice %90 {offsets = [6, 0, 0], sizes = [2, 8, 8], strides = [1, 1, 1]} : vector<8x8x8xf32> to vector<2x8x8xf32>
    %98 = vector.shape_cast %97 : vector<2x8x8xf32> to vector<16x8xf32>
    %99 = tpu.concatenate %92, %94, %96, %98 in 1 : vector<16x8xf32>, vector<16x8xf32>, vector<16x8xf32>, vector<16x8xf32> -> vector<16x32xf32>
    %100 = arith.truncf %99 : vector<16x32xf32> to vector<16x32xbf16>
    %c0_40 = arith.constant 0 : index
    %c0_41 = arith.constant 0 : index
    %c0_42 = arith.constant 0 : index
    %101 = vector.load %arg10[%c0_40, %c0_41, %c0_42] : memref<2x32x32xbf16, #tpu.memory_space<vmem>>, vector<1x32x32xbf16>
    %102 = vector.shape_cast %101 : vector<1x32x32xbf16> to vector<32x32xbf16>
    %c0_43 = arith.constant 0 : index
    %c0_44 = arith.constant 0 : index
    %c0_45 = arith.constant 0 : index
    %103 = vector.load %arg11[%c0_43, %c0_44, %c0_45] : memref<2x1x32xf32, #tpu.memory_space<vmem>>, vector<1x1x32xf32>
    %104 = vector.shape_cast %103 : vector<1x1x32xf32> to vector<1x32xf32>
    %cst_46 = arith.constant dense<0.000000e+00> : vector<16x32xf32>
    %105 = tpu.matmul %100, %102, %cst_46 {dimension_numbers = #tpu.dot_dimension_numbers<[1], [0], [0], [1], [0, 0, 1, 1], [], []>} : vector<16x32xbf16>, vector<32x32xbf16>, vector<16x32xf32> -> vector<16x32xf32>
    %106 = vector.broadcast %104 : vector<1x32xf32> to vector<16x32xf32>
    %107 = arith.addf %105, %106 : vector<16x32xf32>
    %108 = arith.addf %107, %30 : vector<16x32xf32>
    %c0_47 = arith.constant 0 : index
    %c0_48 = arith.constant 0 : index
    %c0_49 = arith.constant 0 : index
    %109 = vector.load %arg12[%c0_47, %c0_48, %c0_49] : memref<2x1x32xf32, #tpu.memory_space<vmem>>, vector<1x1x32xf32>
    %110 = vector.shape_cast %109 : vector<1x1x32xf32> to vector<1x32xf32>
    %c0_50 = arith.constant 0 : index
    %c0_51 = arith.constant 0 : index
    %c0_52 = arith.constant 0 : index
    %111 = vector.load %arg13[%c0_50, %c0_51, %c0_52] : memref<2x1x32xf32, #tpu.memory_space<vmem>>, vector<1x1x32xf32>
    %112 = vector.shape_cast %111 : vector<1x1x32xf32> to vector<1x32xf32>
    %cst_53 = arith.constant dense<0.000000e+00> : vector<16xf32>
    %113 = vector.multi_reduction <add>, %108, %cst_53 [1] : vector<16x32xf32> to vector<16xf32>
    %114 = vector.shape_cast %113 : vector<16xf32> to vector<16x1xf32>
    %cst_54 = arith.constant 3.200000e+01 : f32
    %115 = vector.broadcast %cst_54 : f32 to vector<16x1xf32>
    %116 = arith.divf %114, %115 : vector<16x1xf32>
    %117 = vector.broadcast %116 : vector<16x1xf32> to vector<16x32xf32>
    %118 = arith.subf %108, %117 : vector<16x32xf32>
    %119 = arith.mulf %118, %118 : vector<16x32xf32>
    %cst_55 = arith.constant dense<0.000000e+00> : vector<16xf32>
    %120 = vector.multi_reduction <add>, %119, %cst_55 [1] : vector<16x32xf32> to vector<16xf32>
    %121 = vector.shape_cast %120 : vector<16xf32> to vector<16x1xf32>
    %cst_56 = arith.constant 3.200000e+01 : f32
    %122 = vector.broadcast %cst_56 : f32 to vector<16x1xf32>
    %123 = arith.divf %121, %122 : vector<16x1xf32>
    %124 = vector.broadcast %116 : vector<16x1xf32> to vector<16x32xf32>
    %125 = arith.subf %108, %124 : vector<16x32xf32>
    %cst_57 = arith.constant 9.99999996E-13 : f32
    %126 = vector.broadcast %cst_57 : f32 to vector<16x1xf32>
    %127 = arith.addf %123, %126 : vector<16x1xf32>
    %128 = math.rsqrt %127 : vector<16x1xf32>
    %129 = vector.broadcast %128 : vector<16x1xf32> to vector<16x32xf32>
    %130 = arith.mulf %125, %129 : vector<16x32xf32>
    %131 = vector.broadcast %110 : vector<1x32xf32> to vector<16x32xf32>
    %132 = arith.mulf %130, %131 : vector<16x32xf32>
    %133 = vector.broadcast %112 : vector<1x32xf32> to vector<16x32xf32>
    %134 = arith.addf %132, %133 : vector<16x32xf32>
    %135 = arith.truncf %134 : vector<16x32xf32> to vector<16x32xbf16>
    %c0_58 = arith.constant 0 : index
    %c0_59 = arith.constant 0 : index
    %c0_60 = arith.constant 0 : index
    %136 = vector.load %arg14[%c0_58, %c0_59, %c0_60] : memref<2x32x64xbf16, #tpu.memory_space<vmem>>, vector<1x32x64xbf16>
    %137 = vector.shape_cast %136 : vector<1x32x64xbf16> to vector<32x64xbf16>
    %c0_61 = arith.constant 0 : index
    %c0_62 = arith.constant 0 : index
    %c0_63 = arith.constant 0 : index
    %138 = vector.load %arg15[%c0_61, %c0_62, %c0_63] : memref<2x1x64xf32, #tpu.memory_space<vmem>>, vector<1x1x64xf32>
    %139 = vector.shape_cast %138 : vector<1x1x64xf32> to vector<1x64xf32>
    %cst_64 = arith.constant dense<0.000000e+00> : vector<16x64xf32>
    %140 = tpu.matmul %135, %137, %cst_64 {dimension_numbers = #tpu.dot_dimension_numbers<[1], [0], [0], [1], [0, 0, 1, 1], [], []>} : vector<16x32xbf16>, vector<32x64xbf16>, vector<16x64xf32> -> vector<16x64xf32>
    %141 = vector.broadcast %139 : vector<1x64xf32> to vector<16x64xf32>
    %142 = arith.addf %140, %141 : vector<16x64xf32>
    %143 = arith.mulf %142, %142 : vector<16x64xf32>
    %144 = arith.mulf %142, %143 : vector<16x64xf32>
    %cst_65 = arith.constant 4.471500e-02 : f32
    %145 = vector.broadcast %cst_65 : f32 to vector<16x64xf32>
    %146 = arith.mulf %145, %144 : vector<16x64xf32>
    %147 = arith.addf %142, %146 : vector<16x64xf32>
    %cst_66 = arith.constant 0.797884583 : f32
    %148 = vector.broadcast %cst_66 : f32 to vector<16x64xf32>
    %149 = arith.mulf %148, %147 : vector<16x64xf32>
    %150 = math.tanh %149 : vector<16x64xf32>
    %cst_67 = arith.constant 1.000000e+00 : f32
    %151 = vector.broadcast %cst_67 : f32 to vector<16x64xf32>
    %152 = arith.addf %151, %150 : vector<16x64xf32>
    %cst_68 = arith.constant 5.000000e-01 : f32
    %153 = vector.broadcast %cst_68 : f32 to vector<16x64xf32>
    %154 = arith.mulf %153, %152 : vector<16x64xf32>
    %155 = arith.mulf %142, %154 : vector<16x64xf32>
    %156 = arith.truncf %155 : vector<16x64xf32> to vector<16x64xbf16>
    %c0_69 = arith.constant 0 : index
    %c0_70 = arith.constant 0 : index
    %c0_71 = arith.constant 0 : index
    %157 = vector.load %arg16[%c0_69, %c0_70, %c0_71] : memref<2x64x32xbf16, #tpu.memory_space<vmem>>, vector<1x64x32xbf16>
    %158 = vector.shape_cast %157 : vector<1x64x32xbf16> to vector<64x32xbf16>
    %c0_72 = arith.constant 0 : index
    %c0_73 = arith.constant 0 : index
    %c0_74 = arith.constant 0 : index
    %159 = vector.load %arg17[%c0_72, %c0_73, %c0_74] : memref<2x1x32xf32, #tpu.memory_space<vmem>>, vector<1x1x32xf32>
    %160 = vector.shape_cast %159 : vector<1x1x32xf32> to vector<1x32xf32>
    %cst_75 = arith.constant dense<0.000000e+00> : vector<16x32xf32>
    %161 = tpu.matmul %156, %158, %cst_75 {dimension_numbers = #tpu.dot_dimension_numbers<[1], [0], [0], [1], [0, 0, 1, 1], [], []>} : vector<16x64xbf16>, vector<64x32xbf16>, vector<16x32xf32> -> vector<16x32xf32>
    %162 = vector.broadcast %160 : vector<1x32xf32> to vector<16x32xf32>
    %163 = arith.addf %161, %162 : vector<16x32xf32>
    %164 = arith.addf %163, %134 : vector<16x32xf32>
    %c0_76 = arith.constant 0 : index
    %c0_77 = arith.constant 0 : index
    %c0_78 = arith.constant 0 : index
    %165 = vector.load %arg18[%c0_76, %c0_77, %c0_78] : memref<2x1x32xf32, #tpu.memory_space<vmem>>, vector<1x1x32xf32>
    %166 = vector.shape_cast %165 : vector<1x1x32xf32> to vector<1x32xf32>
    %c0_79 = arith.constant 0 : index
    %c0_80 = arith.constant 0 : index
    %c0_81 = arith.constant 0 : index
    %167 = vector.load %arg19[%c0_79, %c0_80, %c0_81] : memref<2x1x32xf32, #tpu.memory_space<vmem>>, vector<1x1x32xf32>
    %168 = vector.shape_cast %167 : vector<1x1x32xf32> to vector<1x32xf32>
    %cst_82 = arith.constant dense<0.000000e+00> : vector<16xf32>
    %169 = vector.multi_reduction <add>, %164, %cst_82 [1] : vector<16x32xf32> to vector<16xf32>
    %170 = vector.shape_cast %169 : vector<16xf32> to vector<16x1xf32>
    %cst_83 = arith.constant 3.200000e+01 : f32
    %171 = vector.broadcast %cst_83 : f32 to vector<16x1xf32>
    %172 = arith.divf %170, %171 : vector<16x1xf32>
    %173 = vector.broadcast %172 : vector<16x1xf32> to vector<16x32xf32>
    %174 = arith.subf %164, %173 : vector<16x32xf32>
    %175 = arith.mulf %174, %174 : vector<16x32xf32>
    %cst_84 = arith.constant dense<0.000000e+00> : vector<16xf32>
    %176 = vector.multi_reduction <add>, %175, %cst_84 [1] : vector<16x32xf32> to vector<16xf32>
    %177 = vector.shape_cast %176 : vector<16xf32> to vector<16x1xf32>
    %cst_85 = arith.constant 3.200000e+01 : f32
    %178 = vector.broadcast %cst_85 : f32 to vector<16x1xf32>
    %179 = arith.divf %177, %178 : vector<16x1xf32>
    %180 = vector.broadcast %172 : vector<16x1xf32> to vector<16x32xf32>
    %181 = arith.subf %164, %180 : vector<16x32xf32>
    %cst_86 = arith.constant 9.99999996E-13 : f32
    %182 = vector.broadcast %cst_86 : f32 to vector<16x1xf32>
    %183 = arith.addf %179, %182 : vector<16x1xf32>
    %184 = math.rsqrt %183 : vector<16x1xf32>
    %185 = vector.broadcast %184 : vector<16x1xf32> to vector<16x32xf32>
    %186 = arith.mulf %181, %185 : vector<16x32xf32>
    %187 = vector.broadcast %166 : vector<1x32xf32> to vector<16x32xf32>
    %188 = arith.mulf %186, %187 : vector<16x32xf32>
    %189 = vector.broadcast %168 : vector<1x32xf32> to vector<16x32xf32>
    %190 = arith.addf %188, %189 : vector<16x32xf32>
    %191 = arith.truncf %190 : vector<16x32xf32> to vector<16x32xbf16>
    %c1 = arith.constant 1 : index
    %c0_87 = arith.constant 0 : index
    %c0_88 = arith.constant 0 : index
    %192 = vector.load %arg4[%c1, %c0_87, %c0_88] : memref<2x32x32xbf16, #tpu.memory_space<vmem>>, vector<1x32x32xbf16>
    %193 = vector.shape_cast %192 : vector<1x32x32xbf16> to vector<32x32xbf16>
    %c1_89 = arith.constant 1 : index
    %c0_90 = arith.constant 0 : index
    %c0_91 = arith.constant 0 : index
    %194 = vector.load %arg5[%c1_89, %c0_90, %c0_91] : memref<2x1x32xf32, #tpu.memory_space<vmem>>, vector<1x1x32xf32>
    %195 = vector.shape_cast %194 : vector<1x1x32xf32> to vector<1x32xf32>
    %cst_92 = arith.constant dense<0.000000e+00> : vector<16x32xf32>
    %196 = tpu.matmul %191, %193, %cst_92 {dimension_numbers = #tpu.dot_dimension_numbers<[1], [0], [0], [1], [0, 0, 1, 1], [], []>} : vector<16x32xbf16>, vector<32x32xbf16>, vector<16x32xf32> -> vector<16x32xf32>
    %197 = vector.broadcast %195 : vector<1x32xf32> to vector<16x32xf32>
    %198 = arith.addf %196, %197 : vector<16x32xf32>
    %199 = vector.shape_cast %198 : vector<16x32xf32> to vector<2x8x32xf32>
    %200 = vector.extract_strided_slice %199 {offsets = [0, 0, 0], sizes = [2, 8, 8], strides = [1, 1, 1]} : vector<2x8x32xf32> to vector<2x8x8xf32>
    %201 = vector.extract_strided_slice %199 {offsets = [0, 0, 8], sizes = [2, 8, 8], strides = [1, 1, 1]} : vector<2x8x32xf32> to vector<2x8x8xf32>
    %202 = vector.extract_strided_slice %199 {offsets = [0, 0, 16], sizes = [2, 8, 8], strides = [1, 1, 1]} : vector<2x8x32xf32> to vector<2x8x8xf32>
    %203 = vector.extract_strided_slice %199 {offsets = [0, 0, 24], sizes = [2, 8, 8], strides = [1, 1, 1]} : vector<2x8x32xf32> to vector<2x8x8xf32>
    %204 = tpu.concatenate %200, %201, %202, %203 in 0 : vector<2x8x8xf32>, vector<2x8x8xf32>, vector<2x8x8xf32>, vector<2x8x8xf32> -> vector<8x8x8xf32>
    %205 = arith.truncf %204 : vector<8x8x8xf32> to vector<8x8x8xbf16>
    %c1_93 = arith.constant 1 : index
    %c0_94 = arith.constant 0 : index
    %c0_95 = arith.constant 0 : index
    %206 = vector.load %arg6[%c1_93, %c0_94, %c0_95] : memref<2x32x32xbf16, #tpu.memory_space<vmem>>, vector<1x32x32xbf16>
    %207 = vector.shape_cast %206 : vector<1x32x32xbf16> to vector<32x32xbf16>
    %c1_96 = arith.constant 1 : index
    %c0_97 = arith.constant 0 : index
    %c0_98 = arith.constant 0 : index
    %208 = vector.load %arg7[%c1_96, %c0_97, %c0_98] : memref<2x1x32xf32, #tpu.memory_space<vmem>>, vector<1x1x32xf32>
    %209 = vector.shape_cast %208 : vector<1x1x32xf32> to vector<1x32xf32>
    %cst_99 = arith.constant dense<0.000000e+00> : vector<16x32xf32>
    %210 = tpu.matmul %191, %207, %cst_99 {dimension_numbers = #tpu.dot_dimension_numbers<[1], [0], [0], [1], [0, 0, 1, 1], [], []>} : vector<16x32xbf16>, vector<32x32xbf16>, vector<16x32xf32> -> vector<16x32xf32>
    %211 = vector.broadcast %209 : vector<1x32xf32> to vector<16x32xf32>
    %212 = arith.addf %210, %211 : vector<16x32xf32>
    %213 = vector.shape_cast %212 : vector<16x32xf32> to vector<2x8x32xf32>
    %214 = vector.extract_strided_slice %213 {offsets = [0, 0, 0], sizes = [2, 8, 8], strides = [1, 1, 1]} : vector<2x8x32xf32> to vector<2x8x8xf32>
    %215 = vector.extract_strided_slice %213 {offsets = [0, 0, 8], sizes = [2, 8, 8], strides = [1, 1, 1]} : vector<2x8x32xf32> to vector<2x8x8xf32>
    %216 = vector.extract_strided_slice %213 {offsets = [0, 0, 16], sizes = [2, 8, 8], strides = [1, 1, 1]} : vector<2x8x32xf32> to vector<2x8x8xf32>
    %217 = vector.extract_strided_slice %213 {offsets = [0, 0, 24], sizes = [2, 8, 8], strides = [1, 1, 1]} : vector<2x8x32xf32> to vector<2x8x8xf32>
    %218 = tpu.concatenate %214, %215, %216, %217 in 0 : vector<2x8x8xf32>, vector<2x8x8xf32>, vector<2x8x8xf32>, vector<2x8x8xf32> -> vector<8x8x8xf32>
    %219 = arith.truncf %218 : vector<8x8x8xf32> to vector<8x8x8xbf16>
    %c1_100 = arith.constant 1 : index
    %c0_101 = arith.constant 0 : index
    %c0_102 = arith.constant 0 : index
    %220 = vector.load %arg8[%c1_100, %c0_101, %c0_102] : memref<2x32x32xbf16, #tpu.memory_space<vmem>>, vector<1x32x32xbf16>
    %221 = vector.shape_cast %220 : vector<1x32x32xbf16> to vector<32x32xbf16>
    %c1_103 = arith.constant 1 : index
    %c0_104 = arith.constant 0 : index
    %c0_105 = arith.constant 0 : index
    %222 = vector.load %arg9[%c1_103, %c0_104, %c0_105] : memref<2x1x32xf32, #tpu.memory_space<vmem>>, vector<1x1x32xf32>
    %223 = vector.shape_cast %222 : vector<1x1x32xf32> to vector<1x32xf32>
    %cst_106 = arith.constant dense<0.000000e+00> : vector<16x32xf32>
    %224 = tpu.matmul %191, %221, %cst_106 {dimension_numbers = #tpu.dot_dimension_numbers<[1], [0], [0], [1], [0, 0, 1, 1], [], []>} : vector<16x32xbf16>, vector<32x32xbf16>, vector<16x32xf32> -> vector<16x32xf32>
    %225 = vector.broadcast %223 : vector<1x32xf32> to vector<16x32xf32>
    %226 = arith.addf %224, %225 : vector<16x32xf32>
    %227 = vector.shape_cast %226 : vector<16x32xf32> to vector<2x8x32xf32>
    %228 = vector.extract_strided_slice %227 {offsets = [0, 0, 0], sizes = [2, 8, 8], strides = [1, 1, 1]} : vector<2x8x32xf32> to vector<2x8x8xf32>
    %229 = vector.extract_strided_slice %227 {offsets = [0, 0, 8], sizes = [2, 8, 8], strides = [1, 1, 1]} : vector<2x8x32xf32> to vector<2x8x8xf32>
    %230 = vector.extract_strided_slice %227 {offsets = [0, 0, 16], sizes = [2, 8, 8], strides = [1, 1, 1]} : vector<2x8x32xf32> to vector<2x8x8xf32>
    %231 = vector.extract_strided_slice %227 {offsets = [0, 0, 24], sizes = [2, 8, 8], strides = [1, 1, 1]} : vector<2x8x32xf32> to vector<2x8x8xf32>
    %232 = tpu.concatenate %228, %229, %230, %231 in 0 : vector<2x8x8xf32>, vector<2x8x8xf32>, vector<2x8x8xf32>, vector<2x8x8xf32> -> vector<8x8x8xf32>
    %233 = arith.truncf %232 : vector<8x8x8xf32> to vector<8x8x8xbf16>
    "tpu.trace_start"() <{level = 10 : i32, message = "gqd,gkd->gqk"}> : () -> ()
    %cst_107 = arith.constant dense<0.000000e+00> : vector<8x8x8xf32>
    %234 = tpu.matmul %205, %219, %cst_107 {dimension_numbers = #tpu.dot_dimension_numbers<[2], [2], [1], [1], [0, 0, 0, 1, 1, 1], [0], [0]>} : vector<8x8x8xbf16>, vector<8x8x8xbf16>, vector<8x8x8xf32> -> vector<8x8x8xf32>
    "tpu.trace_stop"() : () -> ()
    %cst_108 = arith.constant 0.353553385 : f32
    %235 = vector.broadcast %cst_108 : f32 to vector<8x8x8xf32>
    %236 = arith.mulf %234, %235 : vector<8x8x8xf32>
    %237 = vector.broadcast %5 : vector<8x1x8xf32> to vector<8x8x8xf32>
    %238 = arith.addf %236, %237 : vector<8x8x8xf32>
    %cst_109 = arith.constant dense<0xFF800000> : vector<8x8xf32>
    %239 = vector.multi_reduction <maximumf>, %238, %cst_109 [2] : vector<8x8x8xf32> to vector<8x8xf32>
    %240 = vector.shape_cast %239 : vector<8x8xf32> to vector<8x8x1xf32>
    %241 = vector.broadcast %240 : vector<8x8x1xf32> to vector<8x8x8xf32>
    %242 = arith.subf %238, %241 : vector<8x8x8xf32>
    %243 = math.exp %242 : vector<8x8x8xf32>
    %cst_110 = arith.constant dense<0.000000e+00> : vector<8x8xf32>
    %244 = vector.multi_reduction <add>, %243, %cst_110 [2] : vector<8x8x8xf32> to vector<8x8xf32>
    %245 = vector.shape_cast %244 : vector<8x8xf32> to vector<8x8x1xf32>
    %246 = tpu.reciprocal %245 {approx = true} : vector<8x8x1xf32> -> vector<8x8x1xf32>
    %247 = vector.broadcast %246 : vector<8x8x1xf32> to vector<8x8x8xf32>
    %248 = arith.mulf %243, %247 : vector<8x8x8xf32>
    %249 = arith.truncf %248 : vector<8x8x8xf32> to vector<8x8x8xbf16>
    "tpu.trace_start"() <{level = 10 : i32, message = "gqk,gkd->gqd"}> : () -> ()
    %cst_111 = arith.constant dense<0.000000e+00> : vector<8x8x8xf32>
    %250 = tpu.matmul %249, %233, %cst_111 {dimension_numbers = #tpu.dot_dimension_numbers<[2], [1], [1], [2], [0, 0, 0, 1, 1, 2], [0], [0]>} : vector<8x8x8xbf16>, vector<8x8x8xbf16>, vector<8x8x8xf32> -> vector<8x8x8xf32>
    "tpu.trace_stop"() : () -> ()
    %251 = vector.extract_strided_slice %250 {offsets = [0, 0, 0], sizes = [2, 8, 8], strides = [1, 1, 1]} : vector<8x8x8xf32> to vector<2x8x8xf32>
    %252 = vector.shape_cast %251 : vector<2x8x8xf32> to vector<16x8xf32>
    %253 = vector.extract_strided_slice %250 {offsets = [2, 0, 0], sizes = [2, 8, 8], strides = [1, 1, 1]} : vector<8x8x8xf32> to vector<2x8x8xf32>
    %254 = vector.shape_cast %253 : vector<2x8x8xf32> to vector<16x8xf32>
    %255 = vector.extract_strided_slice %250 {offsets = [4, 0, 0], sizes = [2, 8, 8], strides = [1, 1, 1]} : vector<8x8x8xf32> to vector<2x8x8xf32>
    %256 = vector.shape_cast %255 : vector<2x8x8xf32> to vector<16x8xf32>
    %257 = vector.extract_strided_slice %250 {offsets = [6, 0, 0], sizes = [2, 8, 8], strides = [1, 1, 1]} : vector<8x8x8xf32> to vector<2x8x8xf32>
    %258 = vector.shape_cast %257 : vector<2x8x8xf32> to vector<16x8xf32>
    %259 = tpu.concatenate %252, %254, %256, %258 in 1 : vector<16x8xf32>, vector<16x8xf32>, vector<16x8xf32>, vector<16x8xf32> -> vector<16x32xf32>
    %260 = arith.truncf %259 : vector<16x32xf32> to vector<16x32xbf16>
    %c1_112 = arith.constant 1 : index
    %c0_113 = arith.constant 0 : index
    %c0_114 = arith.constant 0 : index
    %261 = vector.load %arg10[%c1_112, %c0_113, %c0_114] : memref<2x32x32xbf16, #tpu.memory_space<vmem>>, vector<1x32x32xbf16>
    %262 = vector.shape_cast %261 : vector<1x32x32xbf16> to vector<32x32xbf16>
    %c1_115 = arith.constant 1 : index
    %c0_116 = arith.constant 0 : index
    %c0_117 = arith.constant 0 : index
    %263 = vector.load %arg11[%c1_115, %c0_116, %c0_117] : memref<2x1x32xf32, #tpu.memory_space<vmem>>, vector<1x1x32xf32>
    %264 = vector.shape_cast %263 : vector<1x1x32xf32> to vector<1x32xf32>
    %cst_118 = arith.constant dense<0.000000e+00> : vector<16x32xf32>
    %265 = tpu.matmul %260, %262, %cst_118 {dimension_numbers = #tpu.dot_dimension_numbers<[1], [0], [0], [1], [0, 0, 1, 1], [], []>} : vector<16x32xbf16>, vector<32x32xbf16>, vector<16x32xf32> -> vector<16x32xf32>
    %266 = vector.broadcast %264 : vector<1x32xf32> to vector<16x32xf32>
    %267 = arith.addf %265, %266 : vector<16x32xf32>
    %268 = arith.addf %267, %190 : vector<16x32xf32>
    %c1_119 = arith.constant 1 : index
    %c0_120 = arith.constant 0 : index
    %c0_121 = arith.constant 0 : index
    %269 = vector.load %arg12[%c1_119, %c0_120, %c0_121] : memref<2x1x32xf32, #tpu.memory_space<vmem>>, vector<1x1x32xf32>
    %270 = vector.shape_cast %269 : vector<1x1x32xf32> to vector<1x32xf32>
    %c1_122 = arith.constant 1 : index
    %c0_123 = arith.constant 0 : index
    %c0_124 = arith.constant 0 : index
    %271 = vector.load %arg13[%c1_122, %c0_123, %c0_124] : memref<2x1x32xf32, #tpu.memory_space<vmem>>, vector<1x1x32xf32>
    %272 = vector.shape_cast %271 : vector<1x1x32xf32> to vector<1x32xf32>
    %cst_125 = arith.constant dense<0.000000e+00> : vector<16xf32>
    %273 = vector.multi_reduction <add>, %268, %cst_125 [1] : vector<16x32xf32> to vector<16xf32>
    %274 = vector.shape_cast %273 : vector<16xf32> to vector<16x1xf32>
    %cst_126 = arith.constant 3.200000e+01 : f32
    %275 = vector.broadcast %cst_126 : f32 to vector<16x1xf32>
    %276 = arith.divf %274, %275 : vector<16x1xf32>
    %277 = vector.broadcast %276 : vector<16x1xf32> to vector<16x32xf32>
    %278 = arith.subf %268, %277 : vector<16x32xf32>
    %279 = arith.mulf %278, %278 : vector<16x32xf32>
    %cst_127 = arith.constant dense<0.000000e+00> : vector<16xf32>
    %280 = vector.multi_reduction <add>, %279, %cst_127 [1] : vector<16x32xf32> to vector<16xf32>
    %281 = vector.shape_cast %280 : vector<16xf32> to vector<16x1xf32>
    %cst_128 = arith.constant 3.200000e+01 : f32
    %282 = vector.broadcast %cst_128 : f32 to vector<16x1xf32>
    %283 = arith.divf %281, %282 : vector<16x1xf32>
    %284 = vector.broadcast %276 : vector<16x1xf32> to vector<16x32xf32>
    %285 = arith.subf %268, %284 : vector<16x32xf32>
    %cst_129 = arith.constant 9.99999996E-13 : f32
    %286 = vector.broadcast %cst_129 : f32 to vector<16x1xf32>
    %287 = arith.addf %283, %286 : vector<16x1xf32>
    %288 = math.rsqrt %287 : vector<16x1xf32>
    %289 = vector.broadcast %288 : vector<16x1xf32> to vector<16x32xf32>
    %290 = arith.mulf %285, %289 : vector<16x32xf32>
    %291 = vector.broadcast %270 : vector<1x32xf32> to vector<16x32xf32>
    %292 = arith.mulf %290, %291 : vector<16x32xf32>
    %293 = vector.broadcast %272 : vector<1x32xf32> to vector<16x32xf32>
    %294 = arith.addf %292, %293 : vector<16x32xf32>
    %295 = arith.truncf %294 : vector<16x32xf32> to vector<16x32xbf16>
    %c1_130 = arith.constant 1 : index
    %c0_131 = arith.constant 0 : index
    %c0_132 = arith.constant 0 : index
    %296 = vector.load %arg14[%c1_130, %c0_131, %c0_132] : memref<2x32x64xbf16, #tpu.memory_space<vmem>>, vector<1x32x64xbf16>
    %297 = vector.shape_cast %296 : vector<1x32x64xbf16> to vector<32x64xbf16>
    %c1_133 = arith.constant 1 : index
    %c0_134 = arith.constant 0 : index
    %c0_135 = arith.constant 0 : index
    %298 = vector.load %arg15[%c1_133, %c0_134, %c0_135] : memref<2x1x64xf32, #tpu.memory_space<vmem>>, vector<1x1x64xf32>
    %299 = vector.shape_cast %298 : vector<1x1x64xf32> to vector<1x64xf32>
    %cst_136 = arith.constant dense<0.000000e+00> : vector<16x64xf32>
    %300 = tpu.matmul %295, %297, %cst_136 {dimension_numbers = #tpu.dot_dimension_numbers<[1], [0], [0], [1], [0, 0, 1, 1], [], []>} : vector<16x32xbf16>, vector<32x64xbf16>, vector<16x64xf32> -> vector<16x64xf32>
    %301 = vector.broadcast %299 : vector<1x64xf32> to vector<16x64xf32>
    %302 = arith.addf %300, %301 : vector<16x64xf32>
    %303 = arith.mulf %302, %302 : vector<16x64xf32>
    %304 = arith.mulf %302, %303 : vector<16x64xf32>
    %cst_137 = arith.constant 4.471500e-02 : f32
    %305 = vector.broadcast %cst_137 : f32 to vector<16x64xf32>
    %306 = arith.mulf %305, %304 : vector<16x64xf32>
    %307 = arith.addf %302, %306 : vector<16x64xf32>
    %cst_138 = arith.constant 0.797884583 : f32
    %308 = vector.broadcast %cst_138 : f32 to vector<16x64xf32>
    %309 = arith.mulf %308, %307 : vector<16x64xf32>
    %310 = math.tanh %309 : vector<16x64xf32>
    %cst_139 = arith.constant 1.000000e+00 : f32
    %311 = vector.broadcast %cst_139 : f32 to vector<16x64xf32>
    %312 = arith.addf %311, %310 : vector<16x64xf32>
    %cst_140 = arith.constant 5.000000e-01 : f32
    %313 = vector.broadcast %cst_140 : f32 to vector<16x64xf32>
    %314 = arith.mulf %313, %312 : vector<16x64xf32>
    %315 = arith.mulf %302, %314 : vector<16x64xf32>
    %316 = arith.truncf %315 : vector<16x64xf32> to vector<16x64xbf16>
    %c1_141 = arith.constant 1 : index
    %c0_142 = arith.constant 0 : index
    %c0_143 = arith.constant 0 : index
    %317 = vector.load %arg16[%c1_141, %c0_142, %c0_143] : memref<2x64x32xbf16, #tpu.memory_space<vmem>>, vector<1x64x32xbf16>
    %318 = vector.shape_cast %317 : vector<1x64x32xbf16> to vector<64x32xbf16>
    %c1_144 = arith.constant 1 : index
    %c0_145 = arith.constant 0 : index
    %c0_146 = arith.constant 0 : index
    %319 = vector.load %arg17[%c1_144, %c0_145, %c0_146] : memref<2x1x32xf32, #tpu.memory_space<vmem>>, vector<1x1x32xf32>
    %320 = vector.shape_cast %319 : vector<1x1x32xf32> to vector<1x32xf32>
    %cst_147 = arith.constant dense<0.000000e+00> : vector<16x32xf32>
    %321 = tpu.matmul %316, %318, %cst_147 {dimension_numbers = #tpu.dot_dimension_numbers<[1], [0], [0], [1], [0, 0, 1, 1], [], []>} : vector<16x64xbf16>, vector<64x32xbf16>, vector<16x32xf32> -> vector<16x32xf32>
    %322 = vector.broadcast %320 : vector<1x32xf32> to vector<16x32xf32>
    %323 = arith.addf %321, %322 : vector<16x32xf32>
    %324 = arith.addf %323, %294 : vector<16x32xf32>
    %c1_148 = arith.constant 1 : index
    %c0_149 = arith.constant 0 : index
    %c0_150 = arith.constant 0 : index
    %325 = vector.load %arg18[%c1_148, %c0_149, %c0_150] : memref<2x1x32xf32, #tpu.memory_space<vmem>>, vector<1x1x32xf32>
    %326 = vector.shape_cast %325 : vector<1x1x32xf32> to vector<1x32xf32>
    %c1_151 = arith.constant 1 : index
    %c0_152 = arith.constant 0 : index
    %c0_153 = arith.constant 0 : index
    %327 = vector.load %arg19[%c1_151, %c0_152, %c0_153] : memref<2x1x32xf32, #tpu.memory_space<vmem>>, vector<1x1x32xf32>
    %328 = vector.shape_cast %327 : vector<1x1x32xf32> to vector<1x32xf32>
    %cst_154 = arith.constant dense<0.000000e+00> : vector<16xf32>
    %329 = vector.multi_reduction <add>, %324, %cst_154 [1] : vector<16x32xf32> to vector<16xf32>
    %330 = vector.shape_cast %329 : vector<16xf32> to vector<16x1xf32>
    %cst_155 = arith.constant 3.200000e+01 : f32
    %331 = vector.broadcast %cst_155 : f32 to vector<16x1xf32>
    %332 = arith.divf %330, %331 : vector<16x1xf32>
    %333 = vector.broadcast %332 : vector<16x1xf32> to vector<16x32xf32>
    %334 = arith.subf %324, %333 : vector<16x32xf32>
    %335 = arith.mulf %334, %334 : vector<16x32xf32>
    %cst_156 = arith.constant dense<0.000000e+00> : vector<16xf32>
    %336 = vector.multi_reduction <add>, %335, %cst_156 [1] : vector<16x32xf32> to vector<16xf32>
    %337 = vector.shape_cast %336 : vector<16xf32> to vector<16x1xf32>
    %cst_157 = arith.constant 3.200000e+01 : f32
    %338 = vector.broadcast %cst_157 : f32 to vector<16x1xf32>
    %339 = arith.divf %337, %338 : vector<16x1xf32>
    %340 = vector.broadcast %332 : vector<16x1xf32> to vector<16x32xf32>
    %341 = arith.subf %324, %340 : vector<16x32xf32>
    %cst_158 = arith.constant 9.99999996E-13 : f32
    %342 = vector.broadcast %cst_158 : f32 to vector<16x1xf32>
    %343 = arith.addf %339, %342 : vector<16x1xf32>
    %344 = math.rsqrt %343 : vector<16x1xf32>
    %345 = vector.broadcast %344 : vector<16x1xf32> to vector<16x32xf32>
    %346 = arith.mulf %341, %345 : vector<16x32xf32>
    %347 = vector.broadcast %326 : vector<1x32xf32> to vector<16x32xf32>
    %348 = arith.mulf %346, %347 : vector<16x32xf32>
    %349 = vector.broadcast %328 : vector<1x32xf32> to vector<16x32xf32>
    %350 = arith.addf %348, %349 : vector<16x32xf32>
    %351 = vector.shape_cast %350 : vector<16x32xf32> to vector<2x8x32xf32>
    %352 = vector.extract_strided_slice %351 {offsets = [0, 0, 0], sizes = [2, 1, 32], strides = [1, 1, 1]} : vector<2x8x32xf32> to vector<2x1x32xf32>
    %353 = vector.shape_cast %352 : vector<2x1x32xf32> to vector<2x32xf32>
    %354 = arith.truncf %353 : vector<2x32xf32> to vector<2x32xbf16>
    %c0_159 = arith.constant 0 : index
    %c0_160 = arith.constant 0 : index
    %355 = vector.load %arg20[%c0_159, %c0_160] : memref<32x32xbf16, #tpu.memory_space<vmem>>, vector<32x32xbf16>
    %c0_161 = arith.constant 0 : index
    %c0_162 = arith.constant 0 : index
    %356 = vector.load %arg21[%c0_161, %c0_162] : memref<1x32xf32, #tpu.memory_space<vmem>>, vector<1x32xf32>
    %cst_163 = arith.constant dense<0.000000e+00> : vector<2x32xf32>
    %357 = tpu.matmul %354, %355, %cst_163 {dimension_numbers = #tpu.dot_dimension_numbers<[1], [0], [0], [1], [0, 0, 1, 1], [], []>} : vector<2x32xbf16>, vector<32x32xbf16>, vector<2x32xf32> -> vector<2x32xf32>
    %358 = vector.broadcast %356 : vector<1x32xf32> to vector<2x32xf32>
    %359 = arith.addf %357, %358 : vector<2x32xf32>
    %360 = math.tanh %359 : vector<2x32xf32>
    %c0_164 = arith.constant 0 : index
    %c0_165 = arith.constant 0 : index
    %361 = vector.load %arg22[%c0_164, %c0_165] : memref<1x32xf32, #tpu.memory_space<vmem>>, vector<1x32xf32>
    %362 = vector.broadcast %361 : vector<1x32xf32> to vector<2x32xf32>
    %363 = arith.mulf %360, %362 : vector<2x32xf32>
    %cst_166 = arith.constant dense<0.000000e+00> : vector<2xf32>
    %364 = vector.multi_reduction <add>, %363, %cst_166 [1] : vector<2x32xf32> to vector<2xf32>
    %365 = vector.shape_cast %364 : vector<2xf32> to vector<2x1xf32>
    %c0_167 = arith.constant 0 : index
    %c0_168 = arith.constant 0 : index
    %366 = vector.load %arg23[%c0_167, %c0_168] : memref<1x1xf32, #tpu.memory_space<vmem>>, vector<1x1xf32>
    %367 = vector.broadcast %366 : vector<1x1xf32> to vector<2x1xf32>
    %368 = arith.addf %365, %367 : vector<2x1xf32>
    %369 = arith.negf %368 : vector<2x1xf32>
    %370 = math.exp %369 : vector<2x1xf32>
    %cst_169 = arith.constant 1.000000e+00 : f32
    %371 = vector.broadcast %cst_169 : f32 to vector<2x1xf32>
    %372 = arith.addf %371, %370 : vector<2x1xf32>
    %373 = arith.divf %371, %372 : vector<2x1xf32>
    %c0_170 = arith.constant 0 : index
    %c0_171 = arith.constant 0 : index
    %374 = vector.load %arg24[%c0_170, %c0_171] : memref<2x1xf32, #tpu.memory_space<vmem>>, vector<2x1xf32>
    tpu.vector_store %arg24[%c0_170, %c0_171], %373 {strides = array<i32>} : memref<2x1xf32, #tpu.memory_space<vmem>>, vector<2x1xf32>,
    return
  }
}

</mosaic_0001>

<llo_original>
// kernel: subjectivity_bert_forward.1
$region0: #{subjectivity_bert_forward.1}
  #allocation0 [shape = 'u32[]', space=smem, size = 0x4, offset = 0x4, fixed_abs, tag = 'smem constant byte address 0x4 - core index']
  #allocation1 [shape = 'u32[72,128]{1,0:T(1,128)}', space=vmem, size = 0x9000, scoped, tag = 'internal scratch']
  #allocation2 [shape = 'f32[1,1]{1,0:T(1,128)S(1)}', space=vmem, size = 0x200, scoped, tag = 'scoped memory for subjectivity_bert_forward.1']
  %s0 = inlined_call_operand.vmem [shape: f32[16,32], index: 0, kind: input, shape index: {}]
  %s1 = inlined_call_operand.vmem [shape: f32[2,1,8], index: 1, kind: input, shape index: {}]
  %s2 = inlined_call_operand.vmem [shape: f32[1,32], index: 2, kind: input, shape index: {}]
  %s3 = inlined_call_operand.vmem [shape: f32[1,32], index: 3, kind: input, shape index: {}]
  %s4 = inlined_call_operand.vmem [shape: bf16[2,32,32], index: 4, kind: input, shape index: {}]
  %s5 = inlined_call_operand.vmem [shape: f32[2,1,32], index: 5, kind: input, shape index: {}]
  %s6 = inlined_call_operand.vmem [shape: bf16[2,32,32], index: 6, kind: input, shape index: {}]
  %s7 = inlined_call_operand.vmem [shape: f32[2,1,32], index: 7, kind: input, shape index: {}]
  %s8 = inlined_call_operand.vmem [shape: bf16[2,32,32], index: 8, kind: input, shape index: {}]
  %s9 = inlined_call_operand.vmem [shape: f32[2,1,32], index: 9, kind: input, shape index: {}]
  %s10 = inlined_call_operand.vmem [shape: bf16[2,32,32], index: 10, kind: input, shape index: {}]
  %s11 = inlined_call_operand.vmem [shape: f32[2,1,32], index: 11, kind: input, shape index: {}]
  %s12 = inlined_call_operand.vmem [shape: f32[2,1,32], index: 12, kind: input, shape index: {}]
  %s13 = inlined_call_operand.vmem [shape: f32[2,1,32], index: 13, kind: input, shape index: {}]
  %s14 = inlined_call_operand.vmem [shape: bf16[2,32,64], index: 14, kind: input, shape index: {}]
  %s15 = inlined_call_operand.vmem [shape: f32[2,1,64], index: 15, kind: input, shape index: {}]
  %s16 = inlined_call_operand.vmem [shape: bf16[2,64,32], index: 16, kind: input, shape index: {}]
  %s17 = inlined_call_operand.vmem [shape: f32[2,1,32], index: 17, kind: input, shape index: {}]
  %s18 = inlined_call_operand.vmem [shape: f32[2,1,32], index: 18, kind: input, shape index: {}]
  %s19 = inlined_call_operand.vmem [shape: f32[2,1,32], index: 19, kind: input, shape index: {}]
  %s20 = inlined_call_operand.vmem [shape: bf16[32,32], index: 20, kind: input, shape index: {}]
  %s21 = inlined_call_operand.vmem [shape: f32[1,32], index: 21, kind: input, shape index: {}]
  %s22 = inlined_call_operand.vmem [shape: f32[1,32], index: 22, kind: input, shape index: {}]
  %s23 = inlined_call_operand.<no memory space> [shape: f32[1,1], index: 23, kind: input, shape index: {}]
  %s24 = inlined_call_operand.vmem [shape: f32[2,1], index: 24, kind: output, shape index: {}]
  %s25 = sld [smem:[#allocation0]]
  $region106: #{subjectivity_bert_forward.1} parent=0
    _
  %s27 = ssub.s32 1, %s25
  %s28 = scalar_select 0, %s27, %s25
  %v29 = vstv %s23
  %30 = vst [vmem:[#allocation2] sm:$0x1] %v29
  // Predicated region
  $region2: #{subjectivity_bert_forward.1} parent=0 // pred_check
    _
  $region3: #{subjectivity_bert_forward.1} parent=0 // pred_check_branch
    %32 = sbr.rel (0) target = $region5
  $region4: #{subjectivity_bert_forward.1} parent=0 // pred_region
    _
  $region5: #{subjectivity_bert_forward.1} parent=0 // pred_fallthru
    _
  // Predicated region
  $region6: #{subjectivity_bert_forward.1} parent=0 // pred_check
    _
  $region7: #{subjectivity_bert_forward.1} parent=0 // pred_check_branch
    %34 = sbr.rel (0) target = $region9
  $region8: #{subjectivity_bert_forward.1} parent=0 // pred_region
    _
  $region9: #{subjectivity_bert_forward.1} parent=0 // pred_fallthru
    _
  // Predicated region
  $region10: #{subjectivity_bert_forward.1} parent=0 // pred_check
    _
  $region11: #{subjectivity_bert_forward.1} parent=0 // pred_check_branch
    %36 = sbr.rel (0) target = $region13
  $region12: #{subjectivity_bert_forward.1} parent=0 // pred_region
    _
  $region13: #{subjectivity_bert_forward.1} parent=0 // pred_fallthru
    _
  // Predicated region
  $region14: #{subjectivity_bert_forward.1} parent=0 // pred_check
    _
  $region15: #{subjectivity_bert_forward.1} parent=0 // pred_check_branch
    %38 = sbr.rel (0) target = $region17
  $region16: #{subjectivity_bert_forward.1} parent=0 // pred_region
    _
  $region17: #{subjectivity_bert_forward.1} parent=0 // pred_fallthru
    _
  // Predicated region
  $region18: #{subjectivity_bert_forward.1} parent=0 // pred_check
    _
  $region19: #{subjectivity_bert_forward.1} parent=0 // pred_check_branch
    %40 = sbr.rel (0) target = $region21
  $region20: #{subjectivity_bert_forward.1} parent=0 // pred_region
    _
  $region21: #{subjectivity_bert_forward.1} parent=0 // pred_fallthru
    _
  // Predicated region
  $region22: #{subjectivity_bert_forward.1} parent=0 // pred_check
    _
  $region23: #{subjectivity_bert_forward.1} parent=0 // pred_check_branch
    %42 = sbr.rel (0) target = $region25
  $region24: #{subjectivity_bert_forward.1} parent=0 // pred_region
    _
  $region25: #{subjectivity_bert_forward.1} parent=0 // pred_fallthru
    _
  // Predicated region
  $region26: #{subjectivity_bert_forward.1} parent=0 // pred_check
    _
  $region27: #{subjectivity_bert_forward.1} parent=0 // pred_check_branch
    %44 = sbr.rel (0) target = $region29
  $region28: #{subjectivity_bert_forward.1} parent=0 // pred_region
    _
  $region29: #{subjectivity_bert_forward.1} parent=0 // pred_fallthru
    _
  // Predicated region
  $region30: #{subjectivity_bert_forward.1} parent=0 // pred_check
    _
  $region31: #{subjectivity_bert_forward.1} parent=0 // pred_check_branch
    %46 = sbr.rel (0) target = $region33
  $region32: #{subjectivity_bert_forward.1} parent=0 // pred_region
    _
  $region33: #{subjectivity_bert_forward.1} parent=0 // pred_fallthru
    _
  // Predicated region
  $region34: #{subjectivity_bert_forward.1} parent=0 // pred_check
    _
  $region35: #{subjectivity_bert_forward.1} parent=0 // pred_check_branch
    %48 = sbr.rel (0) target = $region37
  $region36: #{subjectivity_bert_forward.1} parent=0 // pred_region
    _
  $region37: #{subjectivity_bert_forward.1} parent=0 // pred_fallthru
    _
  // Predicated region
  $region38: #{subjectivity_bert_forward.1} parent=0 // pred_check
    _
  $region39: #{subjectivity_bert_forward.1} parent=0 // pred_check_branch
    %50 = sbr.rel (0) target = $region41
  $region40: #{subjectivity_bert_forward.1} parent=0 // pred_region
    _
  $region41: #{subjectivity_bert_forward.1} parent=0 // pred_fallthru
    _
  // Predicated region
  $region42: #{subjectivity_bert_forward.1} parent=0 // pred_check
    _
  $region43: #{subjectivity_bert_forward.1} parent=0 // pred_check_branch
    %52 = sbr.rel (0) target = $region45
  $region44: #{subjectivity_bert_forward.1} parent=0 // pred_region
    _
  $region45: #{subjectivity_bert_forward.1} parent=0 // pred_fallthru
    _
  // Predicated region
  $region46: #{subjectivity_bert_forward.1} parent=0 // pred_check
    _
  $region47: #{subjectivity_bert_forward.1} parent=0 // pred_check_branch
    %54 = sbr.rel (0) target = $region49
  $region48: #{subjectivity_bert_forward.1} parent=0 // pred_region
    _
  $region49: #{subjectivity_bert_forward.1} parent=0 // pred_fallthru
    _
  // Predicated region
  $region50: #{subjectivity_bert_forward.1} parent=0 // pred_check
    _
  $region51: #{subjectivity_bert_forward.1} parent=0 // pred_check_branch
    %56 = sbr.rel (0) target = $region53
  $region52: #{subjectivity_bert_forward.1} parent=0 // pred_region
    _
  $region53: #{subjectivity_bert_forward.1} parent=0 // pred_fallthru
    _
  // Predicated region
  $region54: #{subjectivity_bert_forward.1} parent=0 // pred_check
    _
  $region55: #{subjectivity_bert_forward.1} parent=0 // pred_check_branch
    %58 = sbr.rel (0) target = $region57
  $region56: #{subjectivity_bert_forward.1} parent=0 // pred_region
    _
  $region57: #{subjectivity_bert_forward.1} parent=0 // pred_fallthru
    _
  // Predicated region
  $region58: #{subjectivity_bert_forward.1} parent=0 // pred_check
    _
  $region59: #{subjectivity_bert_forward.1} parent=0 // pred_check_branch
    %60 = sbr.rel (0) target = $region61
  $region60: #{subjectivity_bert_forward.1} parent=0 // pred_region
    _
  $region61: #{subjectivity_bert_forward.1} parent=0 // pred_fallthru
    _
  // Predicated region
  $region62: #{subjectivity_bert_forward.1} parent=0 // pred_check
    _
  $region63: #{subjectivity_bert_forward.1} parent=0 // pred_check_branch
    %62 = sbr.rel (0) target = $region65
  $region64: #{subjectivity_bert_forward.1} parent=0 // pred_region
    _
  $region65: #{subjectivity_bert_forward.1} parent=0 // pred_fallthru
    _
  // Predicated region
  $region66: #{subjectivity_bert_forward.1} parent=0 // pred_check
    _
  $region67: #{subjectivity_bert_forward.1} parent=0 // pred_check_branch
    %64 = sbr.rel (0) target = $region69
  $region68: #{subjectivity_bert_forward.1} parent=0 // pred_region
    _
  $region69: #{subjectivity_bert_forward.1} parent=0 // pred_fallthru
    _
  // Predicated region
  $region70: #{subjectivity_bert_forward.1} parent=0 // pred_check
    _
  $region71: #{subjectivity_bert_forward.1} parent=0 // pred_check_branch
    %66 = sbr.rel (0) target = $region73
  $region72: #{subjectivity_bert_forward.1} parent=0 // pred_region
    _
  $region73: #{subjectivity_bert_forward.1} parent=0 // pred_fallthru
    _
  // Predicated region
  $region74: #{subjectivity_bert_forward.1} parent=0 // pred_check
    _
  $region75: #{subjectivity_bert_forward.1} parent=0 // pred_check_branch
    %68 = sbr.rel (0) target = $region77
  $region76: #{subjectivity_bert_forward.1} parent=0 // pred_region
    _
  $region77: #{subjectivity_bert_forward.1} parent=0 // pred_fallthru
    _
  // Predicated region
  $region78: #{subjectivity_bert_forward.1} parent=0 // pred_check
    _
  $region79: #{subjectivity_bert_forward.1} parent=0 // pred_check_branch
    %70 = sbr.rel (0) target = $region81
  $region80: #{subjectivity_bert_forward.1} parent=0 // pred_region
    _
  $region81: #{subjectivity_bert_forward.1} parent=0 // pred_fallthru
    _
  // Predicated region
  $region82: #{subjectivity_bert_forward.1} parent=0 // pred_check
    _
  $region83: #{subjectivity_bert_forward.1} parent=0 // pred_check_branch
    %72 = sbr.rel (0) target = $region85
  $region84: #{subjectivity_bert_forward.1} parent=0 // pred_region
    _
  $region85: #{subjectivity_bert_forward.1} parent=0 // pred_fallthru
    _
  // Predicated region
  $region86: #{subjectivity_bert_forward.1} parent=0 // pred_check
    _
  $region87: #{subjectivity_bert_forward.1} parent=0 // pred_check_branch
    %74 = sbr.rel (0) target = $region89
  $region88: #{subjectivity_bert_forward.1} parent=0 // pred_region
    _
  $region89: #{subjectivity_bert_forward.1} parent=0 // pred_fallthru
    _
  // Predicated region
  $region90: #{subjectivity_bert_forward.1} parent=0 // pred_check
    _
  $region91: #{subjectivity_bert_forward.1} parent=0 // pred_check_branch
    %76 = sbr.rel (0) target = $region93
  $region92: #{subjectivity_bert_forward.1} parent=0 // pred_region
    _
  $region93: #{subjectivity_bert_forward.1} parent=0 // pred_fallthru
    _
  // Predicated region
  $region94: #{subjectivity_bert_forward.1} parent=0 // pred_check
    _
  $region95: #{subjectivity_bert_forward.1} parent=0 // pred_check_branch
    %78 = sbr.rel (0) target = $region97
  $region96: #{subjectivity_bert_forward.1} parent=0 // pred_region
    _
  $region97: #{subjectivity_bert_forward.1} parent=0 // pred_fallthru
    _
  %v80 = vld [vmem:[%s1] sm:$0x1]
  %v81 = vld [vmem:[%s1 + $0x1] sm:$0x1]
  %v82 = vsub.f32 1.0, %v80
  %v83 = vsub.f32 1.0, %v81
  %v84 = vmul.f32 %v82, -1e+09
  %v85 = vmul.f32 %v83, -1e+09
  %v86 = vld [vmem:[%s0] sm:$0xff]
  %v87 = vld [vmem:[%s0 + $0x8] sm:$0xff]
  %v88 = vld [vmem:[%s2] sm:$0x1]
  %v89 = vld [vmem:[%s3] sm:$0x1]
  %vm90 = vcmask 261120
  %v91 = vsel %vm90, %v86, 0.0
  %92 = vadd.xlane.f32.xlu0 %v91
  %v93 = vpop.xlane.xlu0 %92
  %v94 = vsel %vm90, %v87, 0.0
  %95 = vadd.xlane.f32.xlu0 %v94
  %v96 = vpop.xlane.xlu0 %95
  %v97 = vrcp.pop 32.0
  %v98 = vmul.f32 32.0, %v97
  %v99 = vsub.f32 1.0, %v98
  %v100 = vmul.f32 %v97, %v99
  %v101 = vadd.f32 %v97, %v100
  %vm102 = vweird.f32 %v97
  %v103 = vsel %vm102, %v97, %v101
  %v104 = vmul.f32 %v93, %v103
  %v105 = vmul.f32 %v96, %v103
  %v106 = vsub.f32 %v86, %v104
  %v107 = vsub.f32 %v87, %v105
  %v108 = vmul.f32 %v106, %v106
  %v109 = vmul.f32 %v107, %v107
  %v110 = vsel %vm90, %v108, 0.0
  %111 = vadd.xlane.f32.xlu0 %v110
  %v112 = vpop.xlane.xlu0 %111
  %v113 = vsel %vm90, %v109, 0.0
  %114 = vadd.xlane.f32.xlu0 %v113
  %v115 = vpop.xlane.xlu0 %114
  %v116 = vmul.f32 %v112, %v103
  %v117 = vmul.f32 %v115, %v103
  %v118 = vadd.f32 %v116, 1e-12
  %v119 = vadd.f32 %v117, 1e-12
  %v120 = vrsqrt.pop %v118
  %v121 = vmul.f32 %v120, %v118
  %v122 = vmul.f32 %v121, %v120
  %v123 = vmul.f32 0.5, %v122
  %v124 = vsub.f32 1.5, %v123
  %v125 = vmul.f32 %v120, %v124
  %vm126 = vweird.f32 %v118
  %vm127 = vweird.f32 %v120
  %vm128 = vmor %vm126, %vm127
  %v129 = vsel %vm128, %v120, %v125
  %v130 = vrsqrt.pop %v119
  %v131 = vmul.f32 %v130, %v119
  %v132 = vmul.f32 %v131, %v130
  %v133 = vmul.f32 0.5, %v132
  %v134 = vsub.f32 1.5, %v133
  %v135 = vmul.f32 %v130, %v134
  %vm136 = vweird.f32 %v119
  %vm137 = vweird.f32 %v130
  %vm138 = vmor %vm136, %vm137
  %v139 = vsel %vm138, %v130, %v135
  %v140 = vmul.f32 %v106, %v129
  %v141 = vmul.f32 %v107, %v139
  %v143 = vperm.slane %v88, 0
  %v145 = vmul.f32 %v140, %v143
  %v146 = vmul.f32 %v141, %v143
  %v148 = vperm.slane %v89, 0
  %v150 = vadd.f32 %v145, %v148
  %v151 = vadd.f32 %v146, %v148
  %v152 = vpack.c.bf16 %v151, %v150
  %v153 = vld [vmem:[%s4] sm:$0xf]
  %v154 = vld [vmem:[%s4 + $0x4] sm:$0xf]
  %v155 = vld [vmem:[%s4 + $0x8] sm:$0xf]
  %v156 = vld [vmem:[%s4 + $0xc] sm:$0xf]
  %v157 = vld [vmem:[%s5] sm:$0x1]
  %v159 = vperm.slane %v157, 0
  %v165 = vunpack.c.l.b16 %v153
  %v166 = vunpack.c.l.b16 %v154
  %v167 = vunpack.c.l.b16 %v155
  %v168 = vunpack.c.l.b16 %v156
  %v169 = vpack.c.b16 %v166, %v165
  %v170 = vpack.c.b16 %v168, %v167
  %v174 = vsel %vm90, %v152, 0
  %176 = vmatpush.bf16.msra.mxu0 0
  %177 = vmatpush.bf16.msra.mxu0 0
  %178 = vmatpush.bf16.msra.mxu0 0
  %179 = vmatpush.bf16.msra.mxu0 0
  %180 = vmatpush.bf16.msra.mxu0 0
  %181 = vmatpush.bf16.msra.mxu0 0
  %182 = vmatpush.bf16.msra.mxu0 %v170
  %183 = vmatpush.bf16.msra.mxu0 %v169
  %184 = vmatmul.bf16.gmra.mxu0 %v174
  %v185 = vpop.f32.mrf.mxu0
  %v186 = vadd.f32 %v159, %v185
  %v187 = vpop.f32.mrf.mxu0
  %v188 = vadd.f32 %v159, %v187
  %189 = vdwg.mxu0
  %192 = vrot.lane.b32.xlu0 %v186, 120
  %v193 = vpop.permute.xlu0 %192
  %194 = vrot.lane.b32.xlu0 %v188, 120
  %v195 = vpop.permute.xlu0 %194
  %198 = vrot.lane.b32.xlu0 %v186, 112
  %v199 = vpop.permute.xlu0 %198
  %200 = vrot.lane.b32.xlu0 %v188, 112
  %v201 = vpop.permute.xlu0 %200
  %204 = vrot.lane.b32.xlu0 %v186, 104
  %v205 = vpop.permute.xlu0 %204
  %206 = vrot.lane.b32.xlu0 %v188, 104
  %v207 = vpop.permute.xlu0 %206
  %v210 = vpack.c.bf16 %v186, %v186
  %v211 = vpack.c.bf16 %v188, %v188
  %v212 = vpack.c.bf16 %v193, %v193
  %v213 = vpack.c.bf16 %v195, %v195
  %v214 = vpack.c.bf16 %v199, %v199
  %v215 = vpack.c.bf16 %v201, %v201
  %v216 = vpack.c.bf16 %v205, %v205
  %v217 = vpack.c.bf16 %v207, %v207
  %v218 = vld [vmem:[%s6] sm:$0xf]
  %v219 = vld [vmem:[%s6 + $0x4] sm:$0xf]
  %v220 = vld [vmem:[%s6 + $0x8] sm:$0xf]
  %v221 = vld [vmem:[%s6 + $0xc] sm:$0xf]
  %v222 = vld [vmem:[%s7] sm:$0x1]
  %v224 = vperm.slane %v222, 0
  %v230 = vunpack.c.l.b16 %v218
  %v231 = vunpack.c.l.b16 %v219
  %v232 = vunpack.c.l.b16 %v220
  %v233 = vunpack.c.l.b16 %v221
  %v234 = vpack.c.b16 %v231, %v230
  %v235 = vpack.c.b16 %v233, %v232
  %238 = vmatpush.bf16.msra.mxu0 0
  %239 = vmatpush.bf16.msra.mxu0 0
  %240 = vmatpush.bf16.msra.mxu0 0
  %241 = vmatpush.bf16.msra.mxu0 0
  %242 = vmatpush.bf16.msra.mxu0 0
  %243 = vmatpush.bf16.msra.mxu0 0
  %244 = vmatpush.bf16.msra.mxu0 %v235
  %245 = vmatpush.bf16.msra.mxu0 %v234
  %246 = vmatmul.bf16.gmra.mxu0 %v174
  %v247 = vpop.f32.mrf.mxu0
  %v248 = vadd.f32 %v224, %v247
  %v249 = vpop.f32.mrf.mxu0
  %v250 = vadd.f32 %v224, %v249
  %251 = vdwg.mxu0
  %254 = vrot.lane.b32.xlu0 %v248, 120
  %v255 = vpop.permute.xlu0 %254
  %256 = vrot.lane.b32.xlu0 %v250, 120
  %v257 = vpop.permute.xlu0 %256
  %260 = vrot.lane.b32.xlu0 %v248, 112
  %v261 = vpop.permute.xlu0 %260
  %262 = vrot.lane.b32.xlu0 %v250, 112
  %v263 = vpop.permute.xlu0 %262
  %266 = vrot.lane.b32.xlu0 %v248, 104
  %v267 = vpop.permute.xlu0 %266
  %268 = vrot.lane.b32.xlu0 %v250, 104
  %v269 = vpop.permute.xlu0 %268
  %v272 = vpack.c.bf16 %v248, %v248
  %v273 = vpack.c.bf16 %v250, %v250
  %v274 = vpack.c.bf16 %v255, %v255
  %v275 = vpack.c.bf16 %v257, %v257
  %v276 = vpack.c.bf16 %v261, %v261
  %v277 = vpack.c.bf16 %v263, %v263
  %v278 = vpack.c.bf16 %v267, %v267
  %v279 = vpack.c.bf16 %v269, %v269
  %v280 = vld [vmem:[%s8] sm:$0xf]
  %v281 = vld [vmem:[%s8 + $0x4] sm:$0xf]
  %v282 = vld [vmem:[%s8 + $0x8] sm:$0xf]
  %v283 = vld [vmem:[%s8 + $0xc] sm:$0xf]
  %v284 = vld [vmem:[%s9] sm:$0x1]
  %v286 = vperm.slane %v284, 0
  %v292 = vunpack.c.l.b16 %v280
  %v293 = vunpack.c.l.b16 %v281
  %v294 = vunpack.c.l.b16 %v282
  %v295 = vunpack.c.l.b16 %v283
  %v296 = vpack.c.b16 %v293, %v292
  %v297 = vpack.c.b16 %v295, %v294
  %300 = vmatpush.bf16.msra.mxu0 0
  %301 = vmatpush.bf16.msra.mxu0 0
  %302 = vmatpush.bf16.msra.mxu0 0
  %303 = vmatpush.bf16.msra.mxu0 0
  %304 = vmatpush.bf16.msra.mxu0 0
  %305 = vmatpush.bf16.msra.mxu0 0
  %306 = vmatpush.bf16.msra.mxu0 %v297
  %307 = vmatpush.bf16.msra.mxu0 %v296
  %308 = vmatmul.bf16.gmra.mxu0 %v174
  %v309 = vpop.f32.mrf.mxu0
  %v310 = vadd.f32 %v286, %v309
  %v311 = vpop.f32.mrf.mxu0
  %v312 = vadd.f32 %v286, %v311
  %313 = vdwg.mxu0
  %316 = vrot.lane.b32.xlu0 %v310, 120
  %v317 = vpop.permute.xlu0 %316
  %318 = vrot.lane.b32.xlu0 %v312, 120
  %v319 = vpop.permute.xlu0 %318
  %322 = vrot.lane.b32.xlu0 %v310, 112
  %v323 = vpop.permute.xlu0 %322
  %324 = vrot.lane.b32.xlu0 %v312, 112
  %v325 = vpop.permute.xlu0 %324
  %328 = vrot.lane.b32.xlu0 %v310, 104
  %v329 = vpop.permute.xlu0 %328
  %330 = vrot.lane.b32.xlu0 %v312, 104
  %v331 = vpop.permute.xlu0 %330
  %v334 = vpack.c.bf16 %v310, %v310
  %v335 = vpack.c.bf16 %v312, %v312
  %v336 = vpack.c.bf16 %v317, %v317
  %v337 = vpack.c.bf16 %v319, %v319
  %v338 = vpack.c.bf16 %v323, %v323
  %v339 = vpack.c.bf16 %v325, %v325
  %v340 = vpack.c.bf16 %v329, %v329
  %v341 = vpack.c.bf16 %v331, %v331
  %vm342 = vcmask 64512
  %v344 = vsel %vm342, %v210, 0
  %v347 = vsel %vm342, %v272, 0
  %349 = vmatpush.bf16.xpose.msra.mxu0 0
  %350 = vmatpush.bf16.xpose.msra.mxu0 0
  %351 = vmatpush.bf16.xpose.msra.mxu0 0
  %352 = vmatpush.bf16.xpose.msra.mxu0 0
  %353 = vmatpush.bf16.xpose.msra.mxu0 0
  %354 = vmatpush.bf16.xpose.msra.mxu0 0
  %355 = vmatpush.bf16.xpose.msra.mxu0 0
  %356 = vmatpush.bf16.xpose.msra.mxu0 %v347
  %357 = vmatmul.bf16.gmra.mxu0 %v344
  %v358 = vpop.f32.mrf.mxu0
  %v359 = vadd.f32 0.0, %v358
  %v360 = vpop.f32.mrf.mxu0
  %361 = vdwg.mxu0
  %v363 = vsel %vm342, %v211, 0
  %v366 = vsel %vm342, %v273, 0
  %368 = vmatpush.bf16.xpose.msra.mxu0 0
  %369 = vmatpush.bf16.xpose.msra.mxu0 0
  %370 = vmatpush.bf16.xpose.msra.mxu0 0
  %371 = vmatpush.bf16.xpose.msra.mxu0 0
  %372 = vmatpush.bf16.xpose.msra.mxu0 0
  %373 = vmatpush.bf16.xpose.msra.mxu0 0
  %374 = vmatpush.bf16.xpose.msra.mxu0 0
  %375 = vmatpush.bf16.xpose.msra.mxu0 %v366
  %376 = vmatmul.bf16.gmra.mxu0 %v363
  %v377 = vpop.f32.mrf.mxu0
  %v378 = vadd.f32 0.0, %v377
  %v379 = vpop.f32.mrf.mxu0
  %380 = vdwg.mxu0
  %v382 = vsel %vm342, %v212, 0
  %v385 = vsel %vm342, %v274, 0
  %387 = vmatpush.bf16.xpose.msra.mxu0 0
  %388 = vmatpush.bf16.xpose.msra.mxu0 0
  %389 = vmatpush.bf16.xpose.msra.mxu0 0
  %390 = vmatpush.bf16.xpose.msra.mxu0 0
  %391 = vmatpush.bf16.xpose.msra.mxu0 0
  %392 = vmatpush.bf16.xpose.msra.mxu0 0
  %393 = vmatpush.bf16.xpose.msra.mxu0 0
  %394 = vmatpush.bf16.xpose.msra.mxu0 %v385
  %395 = vmatmul.bf16.gmra.mxu0 %v382
  %v396 = vpop.f32.mrf.mxu0
  %v397 = vadd.f32 0.0, %v396
  %v398 = vpop.f32.mrf.mxu0
  %399 = vdwg.mxu0
  %v401 = vsel %vm342, %v213, 0
  %v404 = vsel %vm342, %v275, 0
  %406 = vmatpush.bf16.xpose.msra.mxu0 0
  %407 = vmatpush.bf16.xpose.msra.mxu0 0
  %408 = vmatpush.bf16.xpose.msra.mxu0 0
  %409 = vmatpush.bf16.xpose.msra.mxu0 0
  %410 = vmatpush.bf16.xpose.msra.mxu0 0
  %411 = vmatpush.bf16.xpose.msra.mxu0 0
  %412 = vmatpush.bf16.xpose.msra.mxu0 0
  %413 = vmatpush.bf16.xpose.msra.mxu0 %v404
  %414 = vmatmul.bf16.gmra.mxu0 %v401
  %v415 = vpop.f32.mrf.mxu0
  %v416 = vadd.f32 0.0, %v415
  %v417 = vpop.f32.mrf.mxu0
  %418 = vdwg.mxu0
  %v420 = vsel %vm342, %v214, 0
  %v423 = vsel %vm342, %v276, 0
  %425 = vmatpush.bf16.xpose.msra.mxu0 0
  %426 = vmatpush.bf16.xpose.msra.mxu0 0
  %427 = vmatpush.bf16.xpose.msra.mxu0 0
  %428 = vmatpush.bf16.xpose.msra.mxu0 0
  %429 = vmatpush.bf16.xpose.msra.mxu0 0
  %430 = vmatpush.bf16.xpose.msra.mxu0 0
  %431 = vmatpush.bf16.xpose.msra.mxu0 0
  %432 = vmatpush.bf16.xpose.msra.mxu0 %v423
  %433 = vmatmul.bf16.gmra.mxu0 %v420
  %v434 = vpop.f32.mrf.mxu0
  %v435 = vadd.f32 0.0, %v434
  %v436 = vpop.f32.mrf.mxu0
  %437 = vdwg.mxu0
  %v439 = vsel %vm342, %v215, 0
  %v442 = vsel %vm342, %v277, 0
  %444 = vmatpush.bf16.xpose.msra.mxu0 0
  %445 = vmatpush.bf16.xpose.msra.mxu0 0
  %446 = vmatpush.bf16.xpose.msra.mxu0 0
  %447 = vmatpush.bf16.xpose.msra.mxu0 0
  %448 = vmatpush.bf16.xpose.msra.mxu0 0
  %449 = vmatpush.bf16.xpose.msra.mxu0 0
  %450 = vmatpush.bf16.xpose.msra.mxu0 0
  %451 = vmatpush.bf16.xpose.msra.mxu0 %v442
  %452 = vmatmul.bf16.gmra.mxu0 %v439
  %v453 = vpop.f32.mrf.mxu0
  %v454 = vadd.f32 0.0, %v453
  %v455 = vpop.f32.mrf.mxu0
  %456 = vdwg.mxu0
  %v458 = vsel %vm342, %v216, 0
  %v461 = vsel %vm342, %v278, 0
  %463 = vmatpush.bf16.xpose.msra.mxu0 0
  %464 = vmatpush.bf16.xpose.msra.mxu0 0
  %465 = vmatpush.bf16.xpose.msra.mxu0 0
  %466 = vmatpush.bf16.xpose.msra.mxu0 0
  %467 = vmatpush.bf16.xpose.msra.mxu0 0
  %468 = vmatpush.bf16.xpose.msra.mxu0 0
  %469 = vmatpush.bf16.xpose.msra.mxu0 0
  %470 = vmatpush.bf16.xpose.msra.mxu0 %v461
  %471 = vmatmul.bf16.gmra.mxu0 %v458
  %v472 = vpop.f32.mrf.mxu0
  %v473 = vadd.f32 0.0, %v472
  %v474 = vpop.f32.mrf.mxu0
  %475 = vdwg.mxu0
  %v477 = vsel %vm342, %v217, 0
  %v480 = vsel %vm342, %v279, 0
  %482 = vmatpush.bf16.xpose.msra.mxu0 0
  %483 = vmatpush.bf16.xpose.msra.mxu0 0
  %484 = vmatpush.bf16.xpose.msra.mxu0 0
  %485 = vmatpush.bf16.xpose.msra.mxu0 0
  %486 = vmatpush.bf16.xpose.msra.mxu0 0
  %487 = vmatpush.bf16.xpose.msra.mxu0 0
  %488 = vmatpush.bf16.xpose.msra.mxu0 0
  %489 = vmatpush.bf16.xpose.msra.mxu0 %v480
  %490 = vmatmul.bf16.gmra.mxu0 %v477
  %v491 = vpop.f32.mrf.mxu0
  %v492 = vadd.f32 0.0, %v491
  %v493 = vpop.f32.mrf.mxu0
  %494 = vdwg.mxu0
  %v495 = vmul.f32 %v359, 0.35355338
  %v496 = vmul.f32 %v378, 0.35355338
  %v497 = vmul.f32 %v397, 0.35355338
  %v498 = vmul.f32 %v416, 0.35355338
  %v499 = vmul.f32 %v435, 0.35355338
  %v500 = vmul.f32 %v454, 0.35355338
  %v501 = vmul.f32 %v473, 0.35355338
  %v502 = vmul.f32 %v492, 0.35355338
  %v505 = vperm.slane %v84, 0
  %v506 = vperm.slane %v85, 0
  %v509 = vadd.f32 %v495, %v505
  %v510 = vadd.f32 %v496, %v506
  %v511 = vadd.f32 %v497, %v505
  %v512 = vadd.f32 %v498, %v506
  %v513 = vadd.f32 %v499, %v505
  %v514 = vadd.f32 %v500, %v506
  %v515 = vadd.f32 %v501, %v505
  %v516 = vadd.f32 %v502, %v506
  %v517 = vsel %vm342, %v509, -inf
  %518 = vmax.xlane.f32.xlu0 %v517
  %v519 = vpop.xlane.xlu0 %518
  %v520 = vsel %vm342, %v510, -inf
  %521 = vmax.xlane.f32.xlu0 %v520
  %v522 = vpop.xlane.xlu0 %521
  %v523 = vsel %vm342, %v511, -inf
  %524 = vmax.xlane.f32.xlu0 %v523
  %v525 = vpop.xlane.xlu0 %524
  %v526 = vsel %vm342, %v512, -inf
  %527 = vmax.xlane.f32.xlu0 %v526
  %v528 = vpop.xlane.xlu0 %527
  %v529 = vsel %vm342, %v513, -inf
  %530 = vmax.xlane.f32.xlu0 %v529
  %v531 = vpop.xlane.xlu0 %530
  %v532 = vsel %vm342, %v514, -inf
  %533 = vmax.xlane.f32.xlu0 %v532
  %v534 = vpop.xlane.xlu0 %533
  %v535 = vsel %vm342, %v515, -inf
  %536 = vmax.xlane.f32.xlu0 %v535
  %v537 = vpop.xlane.xlu0 %536
  %v538 = vsel %vm342, %v516, -inf
  %539 = vmax.xlane.f32.xlu0 %v538
  %v540 = vpop.xlane.xlu0 %539
  %v541 = vsub.f32 %v509, %v519
  %v542 = vsub.f32 %v510, %v522
  %v543 = vsub.f32 %v511, %v525
  %v544 = vsub.f32 %v512, %v528
  %v545 = vsub.f32 %v513, %v531
  %v546 = vsub.f32 %v514, %v534
  %v547 = vsub.f32 %v515, %v537
  %v548 = vsub.f32 %v516, %v540
  %v549 = vmul.f32 %v541, 1.442695
  %v550 = vpow.pop %v549
  %v551 = vmul.f32 %v542, 1.442695
  %v552 = vpow.pop %v551
  %v553 = vmul.f32 %v543, 1.442695
  %v554 = vpow.pop %v553
  %v555 = vmul.f32 %v544, 1.442695
  %v556 = vpow.pop %v555
  %v557 = vmul.f32 %v545, 1.442695
  %v558 = vpow.pop %v557
  %v559 = vmul.f32 %v546, 1.442695
  %v560 = vpow.pop %v559
  %v561 = vmul.f32 %v547, 1.442695
  %v562 = vpow.pop %v561
  %v563 = vmul.f32 %v548, 1.442695
  %v564 = vpow.pop %v563
  %v565 = vsel %vm342, %v550, 0.0
  %566 = vadd.xlane.f32.xlu0 %v565
  %v567 = vpop.xlane.xlu0 %566
  %v568 = vsel %vm342, %v552, 0.0
  %569 = vadd.xlane.f32.xlu0 %v568
  %v570 = vpop.xlane.xlu0 %569
  %v571 = vsel %vm342, %v554, 0.0
  %572 = vadd.xlane.f32.xlu0 %v571
  %v573 = vpop.xlane.xlu0 %572
  %v574 = vsel %vm342, %v556, 0.0
  %575 = vadd.xlane.f32.xlu0 %v574
  %v576 = vpop.xlane.xlu0 %575
  %v577 = vsel %vm342, %v558, 0.0
  %578 = vadd.xlane.f32.xlu0 %v577
  %v579 = vpop.xlane.xlu0 %578
  %v580 = vsel %vm342, %v560, 0.0
  %581 = vadd.xlane.f32.xlu0 %v580
  %v582 = vpop.xlane.xlu0 %581
  %v583 = vsel %vm342, %v562, 0.0
  %584 = vadd.xlane.f32.xlu0 %v583
  %v585 = vpop.xlane.xlu0 %584
  %v586 = vsel %vm342, %v564, 0.0
  %587 = vadd.xlane.f32.xlu0 %v586
  %v588 = vpop.xlane.xlu0 %587
  %v589 = vrcp.pop %v567
  %v590 = vrcp.pop %v570
  %v591 = vrcp.pop %v573
  %v592 = vrcp.pop %v576
  %v593 = vrcp.pop %v579
  %v594 = vrcp.pop %v582
  %v595 = vrcp.pop %v585
  %v596 = vrcp.pop %v588
  %v597 = vmul.f32 %v550, %v589
  %v598 = vmul.f32 %v552, %v590
  %v599 = vmul.f32 %v554, %v591
  %v600 = vmul.f32 %v556, %v592
  %v601 = vmul.f32 %v558, %v593
  %v602 = vmul.f32 %v560, %v594
  %v603 = vmul.f32 %v562, %v595
  %v604 = vmul.f32 %v564, %v596
  %v605 = vpack.c.bf16 %v597, %v597
  %v606 = vpack.c.bf16 %v598, %v598
  %v607 = vpack.c.bf16 %v599, %v599
  %v608 = vpack.c.bf16 %v600, %v600
  %v609 = vpack.c.bf16 %v601, %v601
  %v610 = vpack.c.bf16 %v602, %v602
  %v611 = vpack.c.bf16 %v603, %v603
  %v612 = vpack.c.bf16 %v604, %v604
  %v614 = vsel %vm342, %v605, 0
  %vm616 = vcmask 1043456
  %v618 = vsel %vm616, %v334, 0
  %620 = vmatpush.bf16.msra.mxu0 0
  %621 = vmatpush.bf16.msra.mxu0 0
  %622 = vmatpush.bf16.msra.mxu0 0
  %623 = vmatpush.bf16.msra.mxu0 0
  %624 = vmatpush.bf16.msra.mxu0 0
  %625 = vmatpush.bf16.msra.mxu0 0
  %626 = vmatpush.bf16.msra.mxu0 0
  %627 = vmatpush.bf16.msra.mxu0 %v618
  %628 = vmatmul.bf16.gmra.mxu0 %v614
  %v629 = vpop.f32.mrf.mxu0
  %v630 = vadd.f32 0.0, %v629
  %v631 = vpop.f32.mrf.mxu0
  %632 = vdwg.mxu0
  %v634 = vsel %vm342, %v606, 0
  %v637 = vsel %vm616, %v335, 0
  %639 = vmatpush.bf16.msra.mxu0 0
  %640 = vmatpush.bf16.msra.mxu0 0
  %641 = vmatpush.bf16.msra.mxu0 0
  %642 = vmatpush.bf16.msra.mxu0 0
  %643 = vmatpush.bf16.msra.mxu0 0
  %644 = vmatpush.bf16.msra.mxu0 0
  %645 = vmatpush.bf16.msra.mxu0 0
  %646 = vmatpush.bf16.msra.mxu0 %v637
  %647 = vmatmul.bf16.gmra.mxu0 %v634
  %v648 = vpop.f32.mrf.mxu0
  %v649 = vadd.f32 0.0, %v648
  %v650 = vpop.f32.mrf.mxu0
  %651 = vdwg.mxu0
  %v653 = vsel %vm342, %v607, 0
  %v656 = vsel %vm616, %v336, 0
  %658 = vmatpush.bf16.msra.mxu0 0
  %659 = vmatpush.bf16.msra.mxu0 0
  %660 = vmatpush.bf16.msra.mxu0 0
  %661 = vmatpush.bf16.msra.mxu0 0
  %662 = vmatpush.bf16.msra.mxu0 0
  %663 = vmatpush.bf16.msra.mxu0 0
  %664 = vmatpush.bf16.msra.mxu0 0
  %665 = vmatpush.bf16.msra.mxu0 %v656
  %666 = vmatmul.bf16.gmra.mxu0 %v653
  %v667 = vpop.f32.mrf.mxu0
  %v668 = vadd.f32 0.0, %v667
  %v669 = vpop.f32.mrf.mxu0
  %670 = vdwg.mxu0
  %v672 = vsel %vm342, %v608, 0
  %v675 = vsel %vm616, %v337, 0
  %677 = vmatpush.bf16.msra.mxu0 0
  %678 = vmatpush.bf16.msra.mxu0 0
  %679 = vmatpush.bf16.msra.mxu0 0
  %680 = vmatpush.bf16.msra.mxu0 0
  %681 = vmatpush.bf16.msra.mxu0 0
  %682 = vmatpush.bf16.msra.mxu0 0
  %683 = vmatpush.bf16.msra.mxu0 0
  %684 = vmatpush.bf16.msra.mxu0 %v675
  %685 = vmatmul.bf16.gmra.mxu0 %v672
  %v686 = vpop.f32.mrf.mxu0
  %v687 = vadd.f32 0.0, %v686
  %v688 = vpop.f32.mrf.mxu0
  %689 = vdwg.mxu0
  %v691 = vsel %vm342, %v609, 0
  %v694 = vsel %vm616, %v338, 0
  %696 = vmatpush.bf16.msra.mxu0 0
  %697 = vmatpush.bf16.msra.mxu0 0
  %698 = vmatpush.bf16.msra.mxu0 0
  %699 = vmatpush.bf16.msra.mxu0 0
  %700 = vmatpush.bf16.msra.mxu0 0
  %701 = vmatpush.bf16.msra.mxu0 0
  %702 = vmatpush.bf16.msra.mxu0 0
  %703 = vmatpush.bf16.msra.mxu0 %v694
  %704 = vmatmul.bf16.gmra.mxu0 %v691
  %v705 = vpop.f32.mrf.mxu0
  %v706 = vadd.f32 0.0, %v705
  %v707 = vpop.f32.mrf.mxu0
  %708 = vdwg.mxu0
  %v710 = vsel %vm342, %v610, 0
  %v713 = vsel %vm616, %v339, 0
  %715 = vmatpush.bf16.msra.mxu0 0
  %716 = vmatpush.bf16.msra.mxu0 0
  %717 = vmatpush.bf16.msra.mxu0 0
  %718 = vmatpush.bf16.msra.mxu0 0
  %719 = vmatpush.bf16.msra.mxu0 0
  %720 = vmatpush.bf16.msra.mxu0 0
  %721 = vmatpush.bf16.msra.mxu0 0
  %722 = vmatpush.bf16.msra.mxu0 %v713
  %723 = vmatmul.bf16.gmra.mxu0 %v710
  %v724 = vpop.f32.mrf.mxu0
  %v725 = vadd.f32 0.0, %v724
  %v726 = vpop.f32.mrf.mxu0
  %727 = vdwg.mxu0
  %v729 = vsel %vm342, %v611, 0
  %v732 = vsel %vm616, %v340, 0
  %734 = vmatpush.bf16.msra.mxu0 0
  %735 = vmatpush.bf16.msra.mxu0 0
  %736 = vmatpush.bf16.msra.mxu0 0
  %737 = vmatpush.bf16.msra.mxu0 0
  %738 = vmatpush.bf16.msra.mxu0 0
  %739 = vmatpush.bf16.msra.mxu0 0
  %740 = vmatpush.bf16.msra.mxu0 0
  %741 = vmatpush.bf16.msra.mxu0 %v732
  %742 = vmatmul.bf16.gmra.mxu0 %v729
  %v743 = vpop.f32.mrf.mxu0
  %v744 = vadd.f32 0.0, %v743
  %v745 = vpop.f32.mrf.mxu0
  %746 = vdwg.mxu0
  %v748 = vsel %vm342, %v612, 0
  %v751 = vsel %vm616, %v341, 0
  %753 = vmatpush.bf16.msra.mxu0 0
  %754 = vmatpush.bf16.msra.mxu0 0
  %755 = vmatpush.bf16.msra.mxu0 0
  %756 = vmatpush.bf16.msra.mxu0 0
  %757 = vmatpush.bf16.msra.mxu0 0
  %758 = vmatpush.bf16.msra.mxu0 0
  %759 = vmatpush.bf16.msra.mxu0 0
  %760 = vmatpush.bf16.msra.mxu0 %v751
  %761 = vmatmul.bf16.gmra.mxu0 %v748
  %v762 = vpop.f32.mrf.mxu0
  %v763 = vadd.f32 0.0, %v762
  %v764 = vpop.f32.mrf.mxu0
  %765 = vdwg.mxu0
  %768 = vrot.lane.b32.xlu0 %v668, 8
  %v769 = vpop.permute.xlu0 %768
  %770 = vrot.lane.b32.xlu0 %v687, 8
  %v771 = vpop.permute.xlu0 %770
  %776 = vrot.lane.b32.xlu0 %v706, 16
  %v777 = vpop.permute.xlu0 %776
  %778 = vrot.lane.b32.xlu0 %v725, 16
  %v779 = vpop.permute.xlu0 %778
  %784 = vrot.lane.b32.xlu0 %v744, 24
  %v785 = vpop.permute.xlu0 %784
  %786 = vrot.lane.b32.xlu0 %v763, 24
  %v787 = vpop.permute.xlu0 %786
  %v790 = vsel %vm342, %v630, %v769
  %v791 = vsel %vm342, %v649, %v771
  %vm792 = vcmask 130048
  %v793 = vsel %vm792, %v790, %v777
  %v794 = vsel %vm792, %v791, %v779
  %vm795 = vcmask 195584
  %v796 = vsel %vm795, %v793, %v785
  %v797 = vsel %vm795, %v794, %v787
  %v798 = vpack.c.bf16 %v797, %v796
  %v799 = vld [vmem:[%s10] sm:$0xf]
  %v800 = vld [vmem:[%s10 + $0x4] sm:$0xf]
  %v801 = vld [vmem:[%s10 + $0x8] sm:$0xf]
  %v802 = vld [vmem:[%s10 + $0xc] sm:$0xf]
  %v803 = vld [vmem:[%s11] sm:$0x1]
  %v805 = vperm.slane %v803, 0
  %v811 = vunpack.c.l.b16 %v799
  %v812 = vunpack.c.l.b16 %v800
  %v813 = vunpack.c.l.b16 %v801
  %v814 = vunpack.c.l.b16 %v802
  %v815 = vpack.c.b16 %v812, %v811
  %v816 = vpack.c.b16 %v814, %v813
  %v820 = vsel %vm90, %v798, 0
  %822 = vmatpush.bf16.msra.mxu0 0
  %823 = vmatpush.bf16.msra.mxu0 0
  %824 = vmatpush.bf16.msra.mxu0 0
  %825 = vmatpush.bf16.msra.mxu0 0
  %826 = vmatpush.bf16.msra.mxu0 0
  %827 = vmatpush.bf16.msra.mxu0 0
  %828 = vmatpush.bf16.msra.mxu0 %v816
  %829 = vmatpush.bf16.msra.mxu0 %v815
  %830 = vmatmul.bf16.gmra.mxu0 %v820
  %v831 = vpop.f32.mrf.mxu0
  %v832 = vadd.f32 %v805, %v831
  %v833 = vpop.f32.mrf.mxu0
  %v834 = vadd.f32 %v805, %v833
  %835 = vdwg.mxu0
  %v836 = vadd.f32 %v832, %v150
  %v837 = vadd.f32 %v834, %v151
  %v838 = vld [vmem:[%s12] sm:$0x1]
  %v839 = vld [vmem:[%s13] sm:$0x1]
  %v840 = vsel %vm90, %v836, 0.0
  %841 = vadd.xlane.f32.xlu0 %v840
  %v842 = vpop.xlane.xlu0 %841
  %v843 = vsel %vm90, %v837, 0.0
  %844 = vadd.xlane.f32.xlu0 %v843
  %v845 = vpop.xlane.xlu0 %844
  %v846 = vmul.f32 %v842, %v103
  %v847 = vmul.f32 %v845, %v103
  %v848 = vsub.f32 %v836, %v846
  %v849 = vsub.f32 %v837, %v847
  %v850 = vmul.f32 %v848, %v848
  %v851 = vmul.f32 %v849, %v849
  %v852 = vsel %vm90, %v850, 0.0
  %853 = vadd.xlane.f32.xlu0 %v852
  %v854 = vpop.xlane.xlu0 %853
  %v855 = vsel %vm90, %v851, 0.0
  %856 = vadd.xlane.f32.xlu0 %v855
  %v857 = vpop.xlane.xlu0 %856
  %v858 = vmul.f32 %v854, %v103
  %v859 = vmul.f32 %v857, %v103
  %v860 = vadd.f32 %v858, 1e-12
  %v861 = vadd.f32 %v859, 1e-12
  %v862 = vrsqrt.pop %v860
  %v863 = vmul.f32 %v862, %v860
  %v864 = vmul.f32 %v863, %v862
  %v865 = vmul.f32 0.5, %v864
  %v866 = vsub.f32 1.5, %v865
  %v867 = vmul.f32 %v862, %v866
  %vm868 = vweird.f32 %v860
  %vm869 = vweird.f32 %v862
  %vm870 = vmor %vm868, %vm869
  %v871 = vsel %vm870, %v862, %v867
  %v872 = vrsqrt.pop %v861
  %v873 = vmul.f32 %v872, %v861
  %v874 = vmul.f32 %v873, %v872
  %v875 = vmul.f32 0.5, %v874
  %v876 = vsub.f32 1.5, %v875
  %v877 = vmul.f32 %v872, %v876
  %vm878 = vweird.f32 %v861
  %vm879 = vweird.f32 %v872
  %vm880 = vmor %vm878, %vm879
  %v881 = vsel %vm880, %v872, %v877
  %v882 = vmul.f32 %v848, %v871
  %v883 = vmul.f32 %v849, %v881
  %v885 = vperm.slane %v838, 0
  %v887 = vmul.f32 %v882, %v885
  %v888 = vmul.f32 %v883, %v885
  %v890 = vperm.slane %v839, 0
  %v892 = vadd.f32 %v887, %v890
  %v893 = vadd.f32 %v888, %v890
  %v894 = vpack.c.bf16 %v893, %v892
  %v895 = vld [vmem:[%s14] sm:$0xf]
  %v896 = vld [vmem:[%s14 + $0x4] sm:$0xf]
  %v897 = vld [vmem:[%s14 + $0x8] sm:$0xf]
  %v898 = vld [vmem:[%s14 + $0xc] sm:$0xf]
  %v899 = vld [vmem:[%s15] sm:$0x1]
  %v901 = vperm.slane %v899, 0
  %v907 = vunpack.c.l.b16 %v895
  %v908 = vunpack.c.l.b16 %v896
  %v909 = vunpack.c.l.b16 %v897
  %v910 = vunpack.c.l.b16 %v898
  %v911 = vpack.c.b16 %v908, %v907
  %v912 = vpack.c.b16 %v910, %v909
  %v916 = vsel %vm90, %v894, 0
  %918 = vmatpush.bf16.msra.mxu0 0
  %919 = vmatpush.bf16.msra.mxu0 0
  %920 = vmatpush.bf16.msra.mxu0 0
  %921 = vmatpush.bf16.msra.mxu0 0
  %922 = vmatpush.bf16.msra.mxu0 0
  %923 = vmatpush.bf16.msra.mxu0 0
  %924 = vmatpush.bf16.msra.mxu0 %v912
  %925 = vmatpush.bf16.msra.mxu0 %v911
  %926 = vmatmul.bf16.gmra.mxu0 %v916
  %v927 = vpop.f32.mrf.mxu0
  %v928 = vadd.f32 %v901, %v927
  %v929 = vpop.f32.mrf.mxu0
  %v930 = vadd.f32 %v901, %v929
  %931 = vdwg.mxu0
  %v932 = vmul.f32 %v928, %v928
  %v933 = vmul.f32 %v930, %v930
  %v934 = vmul.f32 %v928, %v932
  %v935 = vmul.f32 %v930, %v933
  %v936 = vmul.f32 %v934, 0.044715
  %v937 = vmul.f32 %v935, 0.044715
  %v938 = vadd.f32 %v928, %v936
  %v939 = vadd.f32 %v930, %v937
  %v940 = vmul.f32 %v938, 0.7978846
  %v941 = vmul.f32 %v939, 0.7978846
  %v942 = vtanh.pop %v940
  %v943 = vtanh.pop %v941
  %v944 = vadd.f32 %v942, 1.0
  %v945 = vadd.f32 %v943, 1.0
  %v946 = vmul.f32 %v944, 0.5
  %v947 = vmul.f32 %v945, 0.5
  %v948 = vmul.f32 %v928, %v946
  %v949 = vmul.f32 %v930, %v947
  %v950 = vpack.c.bf16 %v949, %v948
  %v951 = vld [vmem:[%s16] sm:$0xf]
  %v952 = vld [vmem:[%s16 + $0x4] sm:$0xf]
  %v953 = vld [vmem:[%s16 + $0x8] sm:$0xf]
  %v954 = vld [vmem:[%s16 + $0xc] sm:$0xf]
  %v955 = vld [vmem:[%s16 + $0x10] sm:$0xf]
  %v956 = vld [vmem:[%s16 + $0x14] sm:$0xf]
  %v957 = vld [vmem:[%s16 + $0x18] sm:$0xf]
  %v958 = vld [vmem:[%s16 + $0x1c] sm:$0xf]
  %v959 = vld [vmem:[%s17] sm:$0x1]
  %v961 = vperm.slane %v959, 0
  %v971 = vunpack.c.l.b16 %v951
  %v972 = vunpack.c.l.b16 %v952
  %v973 = vunpack.c.l.b16 %v953
  %v974 = vunpack.c.l.b16 %v954
  %v975 = vunpack.c.l.b16 %v955
  %v976 = vunpack.c.l.b16 %v956
  %v977 = vunpack.c.l.b16 %v957
  %v978 = vunpack.c.l.b16 %v958
  %v979 = vpack.c.b16 %v972, %v971
  %v980 = vpack.c.b16 %v974, %v973
  %v981 = vpack.c.b16 %v976, %v975
  %v982 = vpack.c.b16 %v978, %v977
  %vm987 = vcmask 523264
  %v989 = vsel %vm987, %v950, 0
  %991 = vmatpush.bf16.msra.mxu0 0
  %992 = vmatpush.bf16.msra.mxu0 0
  %993 = vmatpush.bf16.msra.mxu0 0
  %994 = vmatpush.bf16.msra.mxu0 0
  %995 = vmatpush.bf16.msra.mxu0 %v982
  %996 = vmatpush.bf16.msra.mxu0 %v981
  %997 = vmatpush.bf16.msra.mxu0 %v980
  %998 = vmatpush.bf16.msra.mxu0 %v979
  %999 = vmatmul.bf16.gmra.mxu0 %v989
  %v1000 = vpop.f32.mrf.mxu0
  %v1001 = vadd.f32 %v961, %v1000
  %v1002 = vpop.f32.mrf.mxu0
  %v1003 = vadd.f32 %v961, %v1002
  %1004 = vdwg.mxu0
  %v1005 = vadd.f32 %v1001, %v892
  %v1006 = vadd.f32 %v1003, %v893
  %v1007 = vld [vmem:[%s18] sm:$0x1]
  %v1008 = vld [vmem:[%s19] sm:$0x1]
  %v1009 = vsel %vm90, %v1005, 0.0
  %1010 = vadd.xlane.f32.xlu0 %v1009
  %v1011 = vpop.xlane.xlu0 %1010
  %v1012 = vsel %vm90, %v1006, 0.0
  %1013 = vadd.xlane.f32.xlu0 %v1012
  %v1014 = vpop.xlane.xlu0 %1013
  %v1015 = vmul.f32 %v1011, %v103
  %v1016 = vmul.f32 %v1014, %v103
  %v1017 = vsub.f32 %v1005, %v1015
  %v1018 = vsub.f32 %v1006, %v1016
  %v1019 = vmul.f32 %v1017, %v1017
  %v1020 = vmul.f32 %v1018, %v1018
  %v1021 = vsel %vm90, %v1019, 0.0
  %1022 = vadd.xlane.f32.xlu0 %v1021
  %v1023 = vpop.xlane.xlu0 %1022
  %v1024 = vsel %vm90, %v1020, 0.0
  %1025 = vadd.xlane.f32.xlu0 %v1024
  %v1026 = vpop.xlane.xlu0 %1025
  %v1027 = vmul.f32 %v1023, %v103
  %v1028 = vmul.f32 %v1026, %v103
  %v1029 = vadd.f32 %v1027, 1e-12
  %v1030 = vadd.f32 %v1028, 1e-12
  %v1031 = vrsqrt.pop %v1029
  %v1032 = vmul.f32 %v1031, %v1029
  %v1033 = vmul.f32 %v1032, %v1031
  %v1034 = vmul.f32 0.5, %v1033
  %v1035 = vsub.f32 1.5, %v1034
  %v1036 = vmul.f32 %v1031, %v1035
  %vm1037 = vweird.f32 %v1029
  %vm1038 = vweird.f32 %v1031
  %vm1039 = vmor %vm1037, %vm1038
  %v1040 = vsel %vm1039, %v1031, %v1036
  %v1041 = vrsqrt.pop %v1030
  %v1042 = vmul.f32 %v1041, %v1030
  %v1043 = vmul.f32 %v1042, %v1041
  %v1044 = vmul.f32 0.5, %v1043
  %v1045 = vsub.f32 1.5, %v1044
  %v1046 = vmul.f32 %v1041, %v1045
  %vm1047 = vweird.f32 %v1030
  %vm1048 = vweird.f32 %v1041
  %vm1049 = vmor %vm1047, %vm1048
  %v1050 = vsel %vm1049, %v1041, %v1046
  %v1051 = vmul.f32 %v1017, %v1040
  %v1052 = vmul.f32 %v1018, %v1050
  %v1054 = vperm.slane %v1007, 0
  %v1056 = vmul.f32 %v1051, %v1054
  %v1057 = vmul.f32 %v1052, %v1054
  %v1059 = vperm.slane %v1008, 0
  %v1061 = vadd.f32 %v1056, %v1059
  %v1062 = vadd.f32 %v1057, %v1059
  %v1063 = vpack.c.bf16 %v1062, %v1061
  %s1064 = scalar_lea.vmem %s4, 16
  %v1065 = vld [vmem:[%s1064] sm:$0xf]
  %v1066 = vld [vmem:[%s1064 + $0x4] sm:$0xf]
  %v1067 = vld [vmem:[%s1064 + $0x8] sm:$0xf]
  %v1068 = vld [vmem:[%s1064 + $0xc] sm:$0xf]
  %s1069 = scalar_lea.vmem %s5, 1
  %v1070 = vld [vmem:[%s1069] sm:$0x1]
  %v1072 = vperm.slane %v1070, 0
  %v1078 = vunpack.c.l.b16 %v1065
  %v1079 = vunpack.c.l.b16 %v1066
  %v1080 = vunpack.c.l.b16 %v1067
  %v1081 = vunpack.c.l.b16 %v1068
  %v1082 = vpack.c.b16 %v1079, %v1078
  %v1083 = vpack.c.b16 %v1081, %v1080
  %v1087 = vsel %vm90, %v1063, 0
  %1089 = vmatpush.bf16.msra.mxu0 0
  %1090 = vmatpush.bf16.msra.mxu0 0
  %1091 = vmatpush.bf16.msra.mxu0 0
  %1092 = vmatpush.bf16.msra.mxu0 0
  %1093 = vmatpush.bf16.msra.mxu0 0
  %1094 = vmatpush.bf16.msra.mxu0 0
  %1095 = vmatpush.bf16.msra.mxu0 %v1083
  %1096 = vmatpush.bf16.msra.mxu0 %v1082
  %1097 = vmatmul.bf16.gmra.mxu0 %v1087
  %v1098 = vpop.f32.mrf.mxu0
  %v1099 = vadd.f32 %v1072, %v1098
  %v1100 = vpop.f32.mrf.mxu0
  %v1101 = vadd.f32 %v1072, %v1100
  %1102 = vdwg.mxu0
  %1105 = vrot.lane.b32.xlu0 %v1099, 120
  %v1106 = vpop.permute.xlu0 %1105
  %1107 = vrot.lane.b32.xlu0 %v1101, 120
  %v1108 = vpop.permute.xlu0 %1107
  %1111 = vrot.lane.b32.xlu0 %v1099, 112
  %v1112 = vpop.permute.xlu0 %1111
  %1113 = vrot.lane.b32.xlu0 %v1101, 112
  %v1114 = vpop.permute.xlu0 %1113
  %1117 = vrot.lane.b32.xlu0 %v1099, 104
  %v1118 = vpop.permute.xlu0 %1117
  %1119 = vrot.lane.b32.xlu0 %v1101, 104
  %v1120 = vpop.permute.xlu0 %1119
  %v1123 = vpack.c.bf16 %v1099, %v1099
  %v1124 = vpack.c.bf16 %v1101, %v1101
  %v1125 = vpack.c.bf16 %v1106, %v1106
  %v1126 = vpack.c.bf16 %v1108, %v1108
  %v1127 = vpack.c.bf16 %v1112, %v1112
  %v1128 = vpack.c.bf16 %v1114, %v1114
  %v1129 = vpack.c.bf16 %v1118, %v1118
  %v1130 = vpack.c.bf16 %v1120, %v1120
  %s1131 = scalar_lea.vmem %s6, 16
  %v1132 = vld [vmem:[%s1131] sm:$0xf]
  %v1133 = vld [vmem:[%s1131 + $0x4] sm:$0xf]
  %v1134 = vld [vmem:[%s1131 + $0x8] sm:$0xf]
  %v1135 = vld [vmem:[%s1131 + $0xc] sm:$0xf]
  %s1136 = scalar_lea.vmem %s7, 1
  %v1137 = vld [vmem:[%s1136] sm:$0x1]
  %v1139 = vperm.slane %v1137, 0
  %v1145 = vunpack.c.l.b16 %v1132
  %v1146 = vunpack.c.l.b16 %v1133
  %v1147 = vunpack.c.l.b16 %v1134
  %v1148 = vunpack.c.l.b16 %v1135
  %v1149 = vpack.c.b16 %v1146, %v1145
  %v1150 = vpack.c.b16 %v1148, %v1147
  %1153 = vmatpush.bf16.msra.mxu0 0
  %1154 = vmatpush.bf16.msra.mxu0 0
  %1155 = vmatpush.bf16.msra.mxu0 0
  %1156 = vmatpush.bf16.msra.mxu0 0
  %1157 = vmatpush.bf16.msra.mxu0 0
  %1158 = vmatpush.bf16.msra.mxu0 0
  %1159 = vmatpush.bf16.msra.mxu0 %v1150
  %1160 = vmatpush.bf16.msra.mxu0 %v1149
  %1161 = vmatmul.bf16.gmra.mxu0 %v1087
  %v1162 = vpop.f32.mrf.mxu0
  %v1163 = vadd.f32 %v1139, %v1162
  %v1164 = vpop.f32.mrf.mxu0
  %v1165 = vadd.f32 %v1139, %v1164
  %1166 = vdwg.mxu0
  %1169 = vrot.lane.b32.xlu0 %v1163, 120
  %v1170 = vpop.permute.xlu0 %1169
  %1171 = vrot.lane.b32.xlu0 %v1165, 120
  %v1172 = vpop.permute.xlu0 %1171
  %1175 = vrot.lane.b32.xlu0 %v1163, 112
  %v1176 = vpop.permute.xlu0 %1175
  %1177 = vrot.lane.b32.xlu0 %v1165, 112
  %v1178 = vpop.permute.xlu0 %1177
  %1181 = vrot.lane.b32.xlu0 %v1163, 104
  %v1182 = vpop.permute.xlu0 %1181
  %1183 = vrot.lane.b32.xlu0 %v1165, 104
  %v1184 = vpop.permute.xlu0 %1183
  %v1187 = vpack.c.bf16 %v1163, %v1163
  %v1188 = vpack.c.bf16 %v1165, %v1165
  %v1189 = vpack.c.bf16 %v1170, %v1170
  %v1190 = vpack.c.bf16 %v1172, %v1172
  %v1191 = vpack.c.bf16 %v1176, %v1176
  %v1192 = vpack.c.bf16 %v1178, %v1178
  %v1193 = vpack.c.bf16 %v1182, %v1182
  %v1194 = vpack.c.bf16 %v1184, %v1184
  %s1195 = scalar_lea.vmem %s8, 16
  %v1196 = vld [vmem:[%s1195] sm:$0xf]
  %v1197 = vld [vmem:[%s1195 + $0x4] sm:$0xf]
  %v1198 = vld [vmem:[%s1195 + $0x8] sm:$0xf]
  %v1199 = vld [vmem:[%s1195 + $0xc] sm:$0xf]
  %s1200 = scalar_lea.vmem %s9, 1
  %v1201 = vld [vmem:[%s1200] sm:$0x1]
  %v1203 = vperm.slane %v1201, 0
  %v1209 = vunpack.c.l.b16 %v1196
  %v1210 = vunpack.c.l.b16 %v1197
  %v1211 = vunpack.c.l.b16 %v1198
  %v1212 = vunpack.c.l.b16 %v1199
  %v1213 = vpack.c.b16 %v1210, %v1209
  %v1214 = vpack.c.b16 %v1212, %v1211
  %1217 = vmatpush.bf16.msra.mxu0 0
  %1218 = vmatpush.bf16.msra.mxu0 0
  %1219 = vmatpush.bf16.msra.mxu0 0
  %1220 = vmatpush.bf16.msra.mxu0 0
  %1221 = vmatpush.bf16.msra.mxu0 0
  %1222 = vmatpush.bf16.msra.mxu0 0
  %1223 = vmatpush.bf16.msra.mxu0 %v1214
  %1224 = vmatpush.bf16.msra.mxu0 %v1213
  %1225 = vmatmul.bf16.gmra.mxu0 %v1087
  %v1226 = vpop.f32.mrf.mxu0
  %v1227 = vadd.f32 %v1203, %v1226
  %v1228 = vpop.f32.mrf.mxu0
  %v1229 = vadd.f32 %v1203, %v1228
  %1230 = vdwg.mxu0
  %1233 = vrot.lane.b32.xlu0 %v1227, 120
  %v1234 = vpop.permute.xlu0 %1233
  %1235 = vrot.lane.b32.xlu0 %v1229, 120
  %v1236 = vpop.permute.xlu0 %1235
  %1239 = vrot.lane.b32.xlu0 %v1227, 112
  %v1240 = vpop.permute.xlu0 %1239
  %1241 = vrot.lane.b32.xlu0 %v1229, 112
  %v1242 = vpop.permute.xlu0 %1241
  %1245 = vrot.lane.b32.xlu0 %v1227, 104
  %v1246 = vpop.permute.xlu0 %1245
  %1247 = vrot.lane.b32.xlu0 %v1229, 104
  %v1248 = vpop.permute.xlu0 %1247
  %v1251 = vpack.c.bf16 %v1227, %v1227
  %v1252 = vpack.c.bf16 %v1229, %v1229
  %v1253 = vpack.c.bf16 %v1234, %v1234
  %v1254 = vpack.c.bf16 %v1236, %v1236
  %v1255 = vpack.c.bf16 %v1240, %v1240
  %v1256 = vpack.c.bf16 %v1242, %v1242
  %v1257 = vpack.c.bf16 %v1246, %v1246
  %v1258 = vpack.c.bf16 %v1248, %v1248
  %v1260 = vsel %vm342, %v1123, 0
  %v1263 = vsel %vm342, %v1187, 0
  %1265 = vmatpush.bf16.xpose.msra.mxu0 0
  %1266 = vmatpush.bf16.xpose.msra.mxu0 0
  %1267 = vmatpush.bf16.xpose.msra.mxu0 0
  %1268 = vmatpush.bf16.xpose.msra.mxu0 0
  %1269 = vmatpush.bf16.xpose.msra.mxu0 0
  %1270 = vmatpush.bf16.xpose.msra.mxu0 0
  %1271 = vmatpush.bf16.xpose.msra.mxu0 0
  %1272 = vmatpush.bf16.xpose.msra.mxu0 %v1263
  %1273 = vmatmul.bf16.gmra.mxu0 %v1260
  %v1274 = vpop.f32.mrf.mxu0
  %v1275 = vadd.f32 0.0, %v1274
  %v1276 = vpop.f32.mrf.mxu0
  %1277 = vdwg.mxu0
  %v1279 = vsel %vm342, %v1124, 0
  %v1282 = vsel %vm342, %v1188, 0
  %1284 = vmatpush.bf16.xpose.msra.mxu0 0
  %1285 = vmatpush.bf16.xpose.msra.mxu0 0
  %1286 = vmatpush.bf16.xpose.msra.mxu0 0
  %1287 = vmatpush.bf16.xpose.msra.mxu0 0
  %1288 = vmatpush.bf16.xpose.msra.mxu0 0
  %1289 = vmatpush.bf16.xpose.msra.mxu0 0
  %1290 = vmatpush.bf16.xpose.msra.mxu0 0
  %1291 = vmatpush.bf16.xpose.msra.mxu0 %v1282
  %1292 = vmatmul.bf16.gmra.mxu0 %v1279
  %v1293 = vpop.f32.mrf.mxu0
  %v1294 = vadd.f32 0.0, %v1293
  %v1295 = vpop.f32.mrf.mxu0
  %1296 = vdwg.mxu0
  %v1298 = vsel %vm342, %v1125, 0
  %v1301 = vsel %vm342, %v1189, 0
  %1303 = vmatpush.bf16.xpose.msra.mxu0 0
  %1304 = vmatpush.bf16.xpose.msra.mxu0 0
  %1305 = vmatpush.bf16.xpose.msra.mxu0 0
  %1306 = vmatpush.bf16.xpose.msra.mxu0 0
  %1307 = vmatpush.bf16.xpose.msra.mxu0 0
  %1308 = vmatpush.bf16.xpose.msra.mxu0 0
  %1309 = vmatpush.bf16.xpose.msra.mxu0 0
  %1310 = vmatpush.bf16.xpose.msra.mxu0 %v1301
  %1311 = vmatmul.bf16.gmra.mxu0 %v1298
  %v1312 = vpop.f32.mrf.mxu0
  %v1313 = vadd.f32 0.0, %v1312
  %v1314 = vpop.f32.mrf.mxu0
  %1315 = vdwg.mxu0
  %v1317 = vsel %vm342, %v1126, 0
  %v1320 = vsel %vm342, %v1190, 0
  %1322 = vmatpush.bf16.xpose.msra.mxu0 0
  %1323 = vmatpush.bf16.xpose.msra.mxu0 0
  %1324 = vmatpush.bf16.xpose.msra.mxu0 0
  %1325 = vmatpush.bf16.xpose.msra.mxu0 0
  %1326 = vmatpush.bf16.xpose.msra.mxu0 0
  %1327 = vmatpush.bf16.xpose.msra.mxu0 0
  %1328 = vmatpush.bf16.xpose.msra.mxu0 0
  %1329 = vmatpush.bf16.xpose.msra.mxu0 %v1320
  %1330 = vmatmul.bf16.gmra.mxu0 %v1317
  %v1331 = vpop.f32.mrf.mxu0
  %v1332 = vadd.f32 0.0, %v1331
  %v1333 = vpop.f32.mrf.mxu0
  %1334 = vdwg.mxu0
  %v1336 = vsel %vm342, %v1127, 0
  %v1339 = vsel %vm342, %v1191, 0
  %1341 = vmatpush.bf16.xpose.msra.mxu0 0
  %1342 = vmatpush.bf16.xpose.msra.mxu0 0
  %1343 = vmatpush.bf16.xpose.msra.mxu0 0
  %1344 = vmatpush.bf16.xpose.msra.mxu0 0
  %1345 = vmatpush.bf16.xpose.msra.mxu0 0
  %1346 = vmatpush.bf16.xpose.msra.mxu0 0
  %1347 = vmatpush.bf16.xpose.msra.mxu0 0
  %1348 = vmatpush.bf16.xpose.msra.mxu0 %v1339
  %1349 = vmatmul.bf16.gmra.mxu0 %v1336
  %v1350 = vpop.f32.mrf.mxu0
  %v1351 = vadd.f32 0.0, %v1350
  %v1352 = vpop.f32.mrf.mxu0
  %1353 = vdwg.mxu0
  %v1355 = vsel %vm342, %v1128, 0
  %v1358 = vsel %vm342, %v1192, 0
  %1360 = vmatpush.bf16.xpose.msra.mxu0 0
  %1361 = vmatpush.bf16.xpose.msra.mxu0 0
  %1362 = vmatpush.bf16.xpose.msra.mxu0 0
  %1363 = vmatpush.bf16.xpose.msra.mxu0 0
  %1364 = vmatpush.bf16.xpose.msra.mxu0 0
  %1365 = vmatpush.bf16.xpose.msra.mxu0 0
  %1366 = vmatpush.bf16.xpose.msra.mxu0 0
  %1367 = vmatpush.bf16.xpose.msra.mxu0 %v1358
  %1368 = vmatmul.bf16.gmra.mxu0 %v1355
  %v1369 = vpop.f32.mrf.mxu0
  %v1370 = vadd.f32 0.0, %v1369
  %v1371 = vpop.f32.mrf.mxu0
  %1372 = vdwg.mxu0
  %v1374 = vsel %vm342, %v1129, 0
  %v1377 = vsel %vm342, %v1193, 0
  %1379 = vmatpush.bf16.xpose.msra.mxu0 0
  %1380 = vmatpush.bf16.xpose.msra.mxu0 0
  %1381 = vmatpush.bf16.xpose.msra.mxu0 0
  %1382 = vmatpush.bf16.xpose.msra.mxu0 0
  %1383 = vmatpush.bf16.xpose.msra.mxu0 0
  %1384 = vmatpush.bf16.xpose.msra.mxu0 0
  %1385 = vmatpush.bf16.xpose.msra.mxu0 0
  %1386 = vmatpush.bf16.xpose.msra.mxu0 %v1377
  %1387 = vmatmul.bf16.gmra.mxu0 %v1374
  %v1388 = vpop.f32.mrf.mxu0
  %v1389 = vadd.f32 0.0, %v1388
  %v1390 = vpop.f32.mrf.mxu0
  %1391 = vdwg.mxu0
  %v1393 = vsel %vm342, %v1130, 0
  %v1396 = vsel %vm342, %v1194, 0
  %1398 = vmatpush.bf16.xpose.msra.mxu0 0
  %1399 = vmatpush.bf16.xpose.msra.mxu0 0
  %1400 = vmatpush.bf16.xpose.msra.mxu0 0
  %1401 = vmatpush.bf16.xpose.msra.mxu0 0
  %1402 = vmatpush.bf16.xpose.msra.mxu0 0
  %1403 = vmatpush.bf16.xpose.msra.mxu0 0
  %1404 = vmatpush.bf16.xpose.msra.mxu0 0
  %1405 = vmatpush.bf16.xpose.msra.mxu0 %v1396
  %1406 = vmatmul.bf16.gmra.mxu0 %v1393
  %v1407 = vpop.f32.mrf.mxu0
  %v1408 = vadd.f32 0.0, %v1407
  %v1409 = vpop.f32.mrf.mxu0
  %1410 = vdwg.mxu0
  %v1411 = vmul.f32 %v1275, 0.35355338
  %v1412 = vmul.f32 %v1294, 0.35355338
  %v1413 = vmul.f32 %v1313, 0.35355338
  %v1414 = vmul.f32 %v1332, 0.35355338
  %v1415 = vmul.f32 %v1351, 0.35355338
  %v1416 = vmul.f32 %v1370, 0.35355338
  %v1417 = vmul.f32 %v1389, 0.35355338
  %v1418 = vmul.f32 %v1408, 0.35355338
  %v1419 = vadd.f32 %v1411, %v505
  %v1420 = vadd.f32 %v1412, %v506
  %v1421 = vadd.f32 %v1413, %v505
  %v1422 = vadd.f32 %v1414, %v506
  %v1423 = vadd.f32 %v1415, %v505
  %v1424 = vadd.f32 %v1416, %v506
  %v1425 = vadd.f32 %v1417, %v505
  %v1426 = vadd.f32 %v1418, %v506
  %v1427 = vsel %vm342, %v1419, -inf
  %1428 = vmax.xlane.f32.xlu0 %v1427
  %v1429 = vpop.xlane.xlu0 %1428
  %v1430 = vsel %vm342, %v1420, -inf
  %1431 = vmax.xlane.f32.xlu0 %v1430
  %v1432 = vpop.xlane.xlu0 %1431
  %v1433 = vsel %vm342, %v1421, -inf
  %1434 = vmax.xlane.f32.xlu0 %v1433
  %v1435 = vpop.xlane.xlu0 %1434
  %v1436 = vsel %vm342, %v1422, -inf
  %1437 = vmax.xlane.f32.xlu0 %v1436
  %v1438 = vpop.xlane.xlu0 %1437
  %v1439 = vsel %vm342, %v1423, -inf
  %1440 = vmax.xlane.f32.xlu0 %v1439
  %v1441 = vpop.xlane.xlu0 %1440
  %v1442 = vsel %vm342, %v1424, -inf
  %1443 = vmax.xlane.f32.xlu0 %v1442
  %v1444 = vpop.xlane.xlu0 %1443
  %v1445 = vsel %vm342, %v1425, -inf
  %1446 = vmax.xlane.f32.xlu0 %v1445
  %v1447 = vpop.xlane.xlu0 %1446
  %v1448 = vsel %vm342, %v1426, -inf
  %1449 = vmax.xlane.f32.xlu0 %v1448
  %v1450 = vpop.xlane.xlu0 %1449
  %v1451 = vsub.f32 %v1419, %v1429
  %v1452 = vsub.f32 %v1420, %v1432
  %v1453 = vsub.f32 %v1421, %v1435
  %v1454 = vsub.f32 %v1422, %v1438
  %v1455 = vsub.f32 %v1423, %v1441
  %v1456 = vsub.f32 %v1424, %v1444
  %v1457 = vsub.f32 %v1425, %v1447
  %v1458 = vsub.f32 %v1426, %v1450
  %v1459 = vmul.f32 %v1451, 1.442695
  %v1460 = vpow.pop %v1459
  %v1461 = vmul.f32 %v1452, 1.442695
  %v1462 = vpow.pop %v1461
  %v1463 = vmul.f32 %v1453, 1.442695
  %v1464 = vpow.pop %v1463
  %v1465 = vmul.f32 %v1454, 1.442695
  %v1466 = vpow.pop %v1465
  %v1467 = vmul.f32 %v1455, 1.442695
  %v1468 = vpow.pop %v1467
  %v1469 = vmul.f32 %v1456, 1.442695
  %v1470 = vpow.pop %v1469
  %v1471 = vmul.f32 %v1457, 1.442695
  %v1472 = vpow.pop %v1471
  %v1473 = vmul.f32 %v1458, 1.442695
  %v1474 = vpow.pop %v1473
  %v1475 = vsel %vm342, %v1460, 0.0
  %1476 = vadd.xlane.f32.xlu0 %v1475
  %v1477 = vpop.xlane.xlu0 %1476
  %v1478 = vsel %vm342, %v1462, 0.0
  %1479 = vadd.xlane.f32.xlu0 %v1478
  %v1480 = vpop.xlane.xlu0 %1479
  %v1481 = vsel %vm342, %v1464, 0.0
  %1482 = vadd.xlane.f32.xlu0 %v1481
  %v1483 = vpop.xlane.xlu0 %1482
  %v1484 = vsel %vm342, %v1466, 0.0
  %1485 = vadd.xlane.f32.xlu0 %v1484
  %v1486 = vpop.xlane.xlu0 %1485
  %v1487 = vsel %vm342, %v1468, 0.0
  %1488 = vadd.xlane.f32.xlu0 %v1487
  %v1489 = vpop.xlane.xlu0 %1488
  %v1490 = vsel %vm342, %v1470, 0.0
  %1491 = vadd.xlane.f32.xlu0 %v1490
  %v1492 = vpop.xlane.xlu0 %1491
  %v1493 = vsel %vm342, %v1472, 0.0
  %1494 = vadd.xlane.f32.xlu0 %v1493
  %v1495 = vpop.xlane.xlu0 %1494
  %v1496 = vsel %vm342, %v1474, 0.0
  %1497 = vadd.xlane.f32.xlu0 %v1496
  %v1498 = vpop.xlane.xlu0 %1497
  %v1499 = vrcp.pop %v1477
  %v1500 = vrcp.pop %v1480
  %v1501 = vrcp.pop %v1483
  %v1502 = vrcp.pop %v1486
  %v1503 = vrcp.pop %v1489
  %v1504 = vrcp.pop %v1492
  %v1505 = vrcp.pop %v1495
  %v1506 = vrcp.pop %v1498
  %v1507 = vmul.f32 %v1460, %v1499
  %v1508 = vmul.f32 %v1462, %v1500
  %v1509 = vmul.f32 %v1464, %v1501
  %v1510 = vmul.f32 %v1466, %v1502
  %v1511 = vmul.f32 %v1468, %v1503
  %v1512 = vmul.f32 %v1470, %v1504
  %v1513 = vmul.f32 %v1472, %v1505
  %v1514 = vmul.f32 %v1474, %v1506
  %v1515 = vpack.c.bf16 %v1507, %v1507
  %v1516 = vpack.c.bf16 %v1508, %v1508
  %v1517 = vpack.c.bf16 %v1509, %v1509
  %v1518 = vpack.c.bf16 %v1510, %v1510
  %v1519 = vpack.c.bf16 %v1511, %v1511
  %v1520 = vpack.c.bf16 %v1512, %v1512
  %v1521 = vpack.c.bf16 %v1513, %v1513
  %v1522 = vpack.c.bf16 %v1514, %v1514
  %v1524 = vsel %vm342, %v1515, 0
  %v1527 = vsel %vm616, %v1251, 0
  %1529 = vmatpush.bf16.msra.mxu0 0
  %1530 = vmatpush.bf16.msra.mxu0 0
  %1531 = vmatpush.bf16.msra.mxu0 0
  %1532 = vmatpush.bf16.msra.mxu0 0
  %1533 = vmatpush.bf16.msra.mxu0 0
  %1534 = vmatpush.bf16.msra.mxu0 0
  %1535 = vmatpush.bf16.msra.mxu0 0
  %1536 = vmatpush.bf16.msra.mxu0 %v1527
  %1537 = vmatmul.bf16.gmra.mxu0 %v1524
  %v1538 = vpop.f32.mrf.mxu0
  %v1539 = vadd.f32 0.0, %v1538
  %v1540 = vpop.f32.mrf.mxu0
  %1541 = vdwg.mxu0
  %v1543 = vsel %vm342, %v1516, 0
  %v1546 = vsel %vm616, %v1252, 0
  %1548 = vmatpush.bf16.msra.mxu0 0
  %1549 = vmatpush.bf16.msra.mxu0 0
  %1550 = vmatpush.bf16.msra.mxu0 0
  %1551 = vmatpush.bf16.msra.mxu0 0
  %1552 = vmatpush.bf16.msra.mxu0 0
  %1553 = vmatpush.bf16.msra.mxu0 0
  %1554 = vmatpush.bf16.msra.mxu0 0
  %1555 = vmatpush.bf16.msra.mxu0 %v1546
  %1556 = vmatmul.bf16.gmra.mxu0 %v1543
  %v1557 = vpop.f32.mrf.mxu0
  %v1558 = vadd.f32 0.0, %v1557
  %v1559 = vpop.f32.mrf.mxu0
  %1560 = vdwg.mxu0
  %v1562 = vsel %vm342, %v1517, 0
  %v1565 = vsel %vm616, %v1253, 0
  %1567 = vmatpush.bf16.msra.mxu0 0
  %1568 = vmatpush.bf16.msra.mxu0 0
  %1569 = vmatpush.bf16.msra.mxu0 0
  %1570 = vmatpush.bf16.msra.mxu0 0
  %1571 = vmatpush.bf16.msra.mxu0 0
  %1572 = vmatpush.bf16.msra.mxu0 0
  %1573 = vmatpush.bf16.msra.mxu0 0
  %1574 = vmatpush.bf16.msra.mxu0 %v1565
  %1575 = vmatmul.bf16.gmra.mxu0 %v1562
  %v1576 = vpop.f32.mrf.mxu0
  %v1577 = vadd.f32 0.0, %v1576
  %v1578 = vpop.f32.mrf.mxu0
  %1579 = vdwg.mxu0
  %v1581 = vsel %vm342, %v1518, 0
  %v1584 = vsel %vm616, %v1254, 0
  %1586 = vmatpush.bf16.msra.mxu0 0
  %1587 = vmatpush.bf16.msra.mxu0 0
  %1588 = vmatpush.bf16.msra.mxu0 0
  %1589 = vmatpush.bf16.msra.mxu0 0
  %1590 = vmatpush.bf16.msra.mxu0 0
  %1591 = vmatpush.bf16.msra.mxu0 0
  %1592 = vmatpush.bf16.msra.mxu0 0
  %1593 = vmatpush.bf16.msra.mxu0 %v1584
  %1594 = vmatmul.bf16.gmra.mxu0 %v1581
  %v1595 = vpop.f32.mrf.mxu0
  %v1596 = vadd.f32 0.0, %v1595
  %v1597 = vpop.f32.mrf.mxu0
  %1598 = vdwg.mxu0
  %v1600 = vsel %vm342, %v1519, 0
  %v1603 = vsel %vm616, %v1255, 0
  %1605 = vmatpush.bf16.msra.mxu0 0
  %1606 = vmatpush.bf16.msra.mxu0 0
  %1607 = vmatpush.bf16.msra.mxu0 0
  %1608 = vmatpush.bf16.msra.mxu0 0
  %1609 = vmatpush.bf16.msra.mxu0 0
  %1610 = vmatpush.bf16.msra.mxu0 0
  %1611 = vmatpush.bf16.msra.mxu0 0
  %1612 = vmatpush.bf16.msra.mxu0 %v1603
  %1613 = vmatmul.bf16.gmra.mxu0 %v1600
  %v1614 = vpop.f32.mrf.mxu0
  %v1615 = vadd.f32 0.0, %v1614
  %v1616 = vpop.f32.mrf.mxu0
  %1617 = vdwg.mxu0
  %v1619 = vsel %vm342, %v1520, 0
  %v1622 = vsel %vm616, %v1256, 0
  %1624 = vmatpush.bf16.msra.mxu0 0
  %1625 = vmatpush.bf16.msra.mxu0 0
  %1626 = vmatpush.bf16.msra.mxu0 0
  %1627 = vmatpush.bf16.msra.mxu0 0
  %1628 = vmatpush.bf16.msra.mxu0 0
  %1629 = vmatpush.bf16.msra.mxu0 0
  %1630 = vmatpush.bf16.msra.mxu0 0
  %1631 = vmatpush.bf16.msra.mxu0 %v1622
  %1632 = vmatmul.bf16.gmra.mxu0 %v1619
  %v1633 = vpop.f32.mrf.mxu0
  %v1634 = vadd.f32 0.0, %v1633
  %v1635 = vpop.f32.mrf.mxu0
  %1636 = vdwg.mxu0
  %v1638 = vsel %vm342, %v1521, 0
  %v1641 = vsel %vm616, %v1257, 0
  %1643 = vmatpush.bf16.msra.mxu0 0
  %1644 = vmatpush.bf16.msra.mxu0 0
  %1645 = vmatpush.bf16.msra.mxu0 0
  %1646 = vmatpush.bf16.msra.mxu0 0
  %1647 = vmatpush.bf16.msra.mxu0 0
  %1648 = vmatpush.bf16.msra.mxu0 0
  %1649 = vmatpush.bf16.msra.mxu0 0
  %1650 = vmatpush.bf16.msra.mxu0 %v1641
  %1651 = vmatmul.bf16.gmra.mxu0 %v1638
  %v1652 = vpop.f32.mrf.mxu0
  %v1653 = vadd.f32 0.0, %v1652
  %v1654 = vpop.f32.mrf.mxu0
  %1655 = vdwg.mxu0
  %v1657 = vsel %vm342, %v1522, 0
  %v1660 = vsel %vm616, %v1258, 0
  %1662 = vmatpush.bf16.msra.mxu0 0
  %1663 = vmatpush.bf16.msra.mxu0 0
  %1664 = vmatpush.bf16.msra.mxu0 0
  %1665 = vmatpush.bf16.msra.mxu0 0
  %1666 = vmatpush.bf16.msra.mxu0 0
  %1667 = vmatpush.bf16.msra.mxu0 0
  %1668 = vmatpush.bf16.msra.mxu0 0
  %1669 = vmatpush.bf16.msra.mxu0 %v1660
  %1670 = vmatmul.bf16.gmra.mxu0 %v1657
  %v1671 = vpop.f32.mrf.mxu0
  %v1672 = vadd.f32 0.0, %v1671
  %v1673 = vpop.f32.mrf.mxu0
  %1674 = vdwg.mxu0
  %1677 = vrot.lane.b32.xlu0 %v1577, 8
  %v1678 = vpop.permute.xlu0 %1677
  %1679 = vrot.lane.b32.xlu0 %v1596, 8
  %v1680 = vpop.permute.xlu0 %1679
  %1685 = vrot.lane.b32.xlu0 %v1615, 16
  %v1686 = vpop.permute.xlu0 %1685
  %1687 = vrot.lane.b32.xlu0 %v1634, 16
  %v1688 = vpop.permute.xlu0 %1687
  %1693 = vrot.lane.b32.xlu0 %v1653, 24
  %v1694 = vpop.permute.xlu0 %1693
  %1695 = vrot.lane.b32.xlu0 %v1672, 24
  %v1696 = vpop.permute.xlu0 %1695
  %v1699 = vsel %vm342, %v1539, %v1678
  %v1700 = vsel %vm342, %v1558, %v1680
  %v1701 = vsel %vm792, %v1699, %v1686
  %v1702 = vsel %vm792, %v1700, %v1688
  %v1703 = vsel %vm795, %v1701, %v1694
  %v1704 = vsel %vm795, %v1702, %v1696
  %v1705 = vpack.c.bf16 %v1704, %v1703
  %s1706 = scalar_lea.vmem %s10, 16
  %v1707 = vld [vmem:[%s1706] sm:$0xf]
  %v1708 = vld [vmem:[%s1706 + $0x4] sm:$0xf]
  %v1709 = vld [vmem:[%s1706 + $0x8] sm:$0xf]
  %v1710 = vld [vmem:[%s1706 + $0xc] sm:$0xf]
  %s1711 = scalar_lea.vmem %s11, 1
  %v1712 = vld [vmem:[%s1711] sm:$0x1]
  %v1714 = vperm.slane %v1712, 0
  %v1720 = vunpack.c.l.b16 %v1707
  %v1721 = vunpack.c.l.b16 %v1708
  %v1722 = vunpack.c.l.b16 %v1709
  %v1723 = vunpack.c.l.b16 %v1710
  %v1724 = vpack.c.b16 %v1721, %v1720
  %v1725 = vpack.c.b16 %v1723, %v1722
  %v1729 = vsel %vm90, %v1705, 0
  %1731 = vmatpush.bf16.msra.mxu0 0
  %1732 = vmatpush.bf16.msra.mxu0 0
  %1733 = vmatpush.bf16.msra.mxu0 0
  %1734 = vmatpush.bf16.msra.mxu0 0
  %1735 = vmatpush.bf16.msra.mxu0 0
  %1736 = vmatpush.bf16.msra.mxu0 0
  %1737 = vmatpush.bf16.msra.mxu0 %v1725
  %1738 = vmatpush.bf16.msra.mxu0 %v1724
  %1739 = vmatmul.bf16.gmra.mxu0 %v1729
  %v1740 = vpop.f32.mrf.mxu0
  %v1741 = vadd.f32 %v1714, %v1740
  %v1742 = vpop.f32.mrf.mxu0
  %v1743 = vadd.f32 %v1714, %v1742
  %1744 = vdwg.mxu0
  %v1745 = vadd.f32 %v1741, %v1061
  %v1746 = vadd.f32 %v1743, %v1062
  %s1747 = scalar_lea.vmem %s12, 1
  %v1748 = vld [vmem:[%s1747] sm:$0x1]
  %s1749 = scalar_lea.vmem %s13, 1
  %v1750 = vld [vmem:[%s1749] sm:$0x1]
  %v1751 = vsel %vm90, %v1745, 0.0
  %1752 = vadd.xlane.f32.xlu0 %v1751
  %v1753 = vpop.xlane.xlu0 %1752
  %v1754 = vsel %vm90, %v1746, 0.0
  %1755 = vadd.xlane.f32.xlu0 %v1754
  %v1756 = vpop.xlane.xlu0 %1755
  %v1757 = vmul.f32 %v1753, %v103
  %v1758 = vmul.f32 %v1756, %v103
  %v1759 = vsub.f32 %v1745, %v1757
  %v1760 = vsub.f32 %v1746, %v1758
  %v1761 = vmul.f32 %v1759, %v1759
  %v1762 = vmul.f32 %v1760, %v1760
  %v1763 = vsel %vm90, %v1761, 0.0
  %1764 = vadd.xlane.f32.xlu0 %v1763
  %v1765 = vpop.xlane.xlu0 %1764
  %v1766 = vsel %vm90, %v1762, 0.0
  %1767 = vadd.xlane.f32.xlu0 %v1766
  %v1768 = vpop.xlane.xlu0 %1767
  %v1769 = vmul.f32 %v1765, %v103
  %v1770 = vmul.f32 %v1768, %v103
  %v1771 = vadd.f32 %v1769, 1e-12
  %v1772 = vadd.f32 %v1770, 1e-12
  %v1773 = vrsqrt.pop %v1771
  %v1774 = vmul.f32 %v1773, %v1771
  %v1775 = vmul.f32 %v1774, %v1773
  %v1776 = vmul.f32 0.5, %v1775
  %v1777 = vsub.f32 1.5, %v1776
  %v1778 = vmul.f32 %v1773, %v1777
  %vm1779 = vweird.f32 %v1771
  %vm1780 = vweird.f32 %v1773
  %vm1781 = vmor %vm1779, %vm1780
  %v1782 = vsel %vm1781, %v1773, %v1778
  %v1783 = vrsqrt.pop %v1772
  %v1784 = vmul.f32 %v1783, %v1772
  %v1785 = vmul.f32 %v1784, %v1783
  %v1786 = vmul.f32 0.5, %v1785
  %v1787 = vsub.f32 1.5, %v1786
  %v1788 = vmul.f32 %v1783, %v1787
  %vm1789 = vweird.f32 %v1772
  %vm1790 = vweird.f32 %v1783
  %vm1791 = vmor %vm1789, %vm1790
  %v1792 = vsel %vm1791, %v1783, %v1788
  %v1793 = vmul.f32 %v1759, %v1782
  %v1794 = vmul.f32 %v1760, %v1792
  %v1796 = vperm.slane %v1748, 0
  %v1798 = vmul.f32 %v1793, %v1796
  %v1799 = vmul.f32 %v1794, %v1796
  %v1801 = vperm.slane %v1750, 0
  %v1803 = vadd.f32 %v1798, %v1801
  %v1804 = vadd.f32 %v1799, %v1801
  %v1805 = vpack.c.bf16 %v1804, %v1803
  %s1806 = scalar_lea.vmem %s14, 16
  %v1807 = vld [vmem:[%s1806] sm:$0xf]
  %v1808 = vld [vmem:[%s1806 + $0x4] sm:$0xf]
  %v1809 = vld [vmem:[%s1806 + $0x8] sm:$0xf]
  %v1810 = vld [vmem:[%s1806 + $0xc] sm:$0xf]
  %s1811 = scalar_lea.vmem %s15, 1
  %v1812 = vld [vmem:[%s1811] sm:$0x1]
  %v1814 = vperm.slane %v1812, 0
  %v1820 = vunpack.c.l.b16 %v1807
  %v1821 = vunpack.c.l.b16 %v1808
  %v1822 = vunpack.c.l.b16 %v1809
  %v1823 = vunpack.c.l.b16 %v1810
  %v1824 = vpack.c.b16 %v1821, %v1820
  %v1825 = vpack.c.b16 %v1823, %v1822
  %v1829 = vsel %vm90, %v1805, 0
  %1831 = vmatpush.bf16.msra.mxu0 0
  %1832 = vmatpush.bf16.msra.mxu0 0
  %1833 = vmatpush.bf16.msra.mxu0 0
  %1834 = vmatpush.bf16.msra.mxu0 0
  %1835 = vmatpush.bf16.msra.mxu0 0
  %1836 = vmatpush.bf16.msra.mxu0 0
  %1837 = vmatpush.bf16.msra.mxu0 %v1825
  %1838 = vmatpush.bf16.msra.mxu0 %v1824
  %1839 = vmatmul.bf16.gmra.mxu0 %v1829
  %v1840 = vpop.f32.mrf.mxu0
  %v1841 = vadd.f32 %v1814, %v1840
  %v1842 = vpop.f32.mrf.mxu0
  %v1843 = vadd.f32 %v1814, %v1842
  %1844 = vdwg.mxu0
  %v1845 = vmul.f32 %v1841, %v1841
  %v1846 = vmul.f32 %v1843, %v1843
  %v1847 = vmul.f32 %v1841, %v1845
  %v1848 = vmul.f32 %v1843, %v1846
  %v1849 = vmul.f32 %v1847, 0.044715
  %v1850 = vmul.f32 %v1848, 0.044715
  %v1851 = vadd.f32 %v1841, %v1849
  %v1852 = vadd.f32 %v1843, %v1850
  %v1853 = vmul.f32 %v1851, 0.7978846
  %v1854 = vmul.f32 %v1852, 0.7978846
  %v1855 = vtanh.pop %v1853
  %v1856 = vtanh.pop %v1854
  %v1857 = vadd.f32 %v1855, 1.0
  %v1858 = vadd.f32 %v1856, 1.0
  %v1859 = vmul.f32 %v1857, 0.5
  %v1860 = vmul.f32 %v1858, 0.5
  %v1861 = vmul.f32 %v1841, %v1859
  %v1862 = vmul.f32 %v1843, %v1860
  %v1863 = vpack.c.bf16 %v1862, %v1861
  %s1864 = scalar_lea.vmem %s16, 32
  %v1865 = vld [vmem:[%s1864] sm:$0xf]
  %v1866 = vld [vmem:[%s1864 + $0x4] sm:$0xf]
  %v1867 = vld [vmem:[%s1864 + $0x8] sm:$0xf]
  %v1868 = vld [vmem:[%s1864 + $0xc] sm:$0xf]
  %v1869 = vld [vmem:[%s1864 + $0x10] sm:$0xf]
  %v1870 = vld [vmem:[%s1864 + $0x14] sm:$0xf]
  %v1871 = vld [vmem:[%s1864 + $0x18] sm:$0xf]
  %v1872 = vld [vmem:[%s1864 + $0x1c] sm:$0xf]
  %s1873 = scalar_lea.vmem %s17, 1
  %v1874 = vld [vmem:[%s1873] sm:$0x1]
  %v1876 = vperm.slane %v1874, 0
  %v1886 = vunpack.c.l.b16 %v1865
  %v1887 = vunpack.c.l.b16 %v1866
  %v1888 = vunpack.c.l.b16 %v1867
  %v1889 = vunpack.c.l.b16 %v1868
  %v1890 = vunpack.c.l.b16 %v1869
  %v1891 = vunpack.c.l.b16 %v1870
  %v1892 = vunpack.c.l.b16 %v1871
  %v1893 = vunpack.c.l.b16 %v1872
  %v1894 = vpack.c.b16 %v1887, %v1886
  %v1895 = vpack.c.b16 %v1889, %v1888
  %v1896 = vpack.c.b16 %v1891, %v1890
  %v1897 = vpack.c.b16 %v1893, %v1892
  %v1903 = vsel %vm987, %v1863, 0
  %1905 = vmatpush.bf16.msra.mxu0 0
  %1906 = vmatpush.bf16.msra.mxu0 0
  %1907 = vmatpush.bf16.msra.mxu0 0
  %1908 = vmatpush.bf16.msra.mxu0 0
  %1909 = vmatpush.bf16.msra.mxu0 %v1897
  %1910 = vmatpush.bf16.msra.mxu0 %v1896
  %1911 = vmatpush.bf16.msra.mxu0 %v1895
  %1912 = vmatpush.bf16.msra.mxu0 %v1894
  %1913 = vmatmul.bf16.gmra.mxu0 %v1903
  %v1914 = vpop.f32.mrf.mxu0
  %v1915 = vadd.f32 %v1876, %v1914
  %v1916 = vpop.f32.mrf.mxu0
  %v1917 = vadd.f32 %v1876, %v1916
  %1918 = vdwg.mxu0
  %v1919 = vadd.f32 %v1915, %v1803
  %v1920 = vadd.f32 %v1917, %v1804
  %s1921 = scalar_lea.vmem %s18, 1
  %v1922 = vld [vmem:[%s1921] sm:$0x1]
  %s1923 = scalar_lea.vmem %s19, 1
  %v1924 = vld [vmem:[%s1923] sm:$0x1]
  %v1925 = vsel %vm90, %v1919, 0.0
  %1926 = vadd.xlane.f32.xlu0 %v1925
  %v1927 = vpop.xlane.xlu0 %1926
  %v1928 = vsel %vm90, %v1920, 0.0
  %1929 = vadd.xlane.f32.xlu0 %v1928
  %v1930 = vpop.xlane.xlu0 %1929
  %v1931 = vmul.f32 %v1927, %v103
  %v1932 = vmul.f32 %v1930, %v103
  %v1933 = vsub.f32 %v1919, %v1931
  %v1934 = vsub.f32 %v1920, %v1932
  %v1935 = vmul.f32 %v1933, %v1933
  %v1936 = vmul.f32 %v1934, %v1934
  %v1937 = vsel %vm90, %v1935, 0.0
  %1938 = vadd.xlane.f32.xlu0 %v1937
  %v1939 = vpop.xlane.xlu0 %1938
  %v1940 = vsel %vm90, %v1936, 0.0
  %1941 = vadd.xlane.f32.xlu0 %v1940
  %v1942 = vpop.xlane.xlu0 %1941
  %v1943 = vmul.f32 %v1939, %v103
  %v1944 = vmul.f32 %v1942, %v103
  %v1945 = vadd.f32 %v1943, 1e-12
  %v1946 = vadd.f32 %v1944, 1e-12
  %v1947 = vrsqrt.pop %v1945
  %v1948 = vmul.f32 %v1947, %v1945
  %v1949 = vmul.f32 %v1948, %v1947
  %v1950 = vmul.f32 0.5, %v1949
  %v1951 = vsub.f32 1.5, %v1950
  %v1952 = vmul.f32 %v1947, %v1951
  %vm1953 = vweird.f32 %v1945
  %vm1954 = vweird.f32 %v1947
  %vm1955 = vmor %vm1953, %vm1954
  %v1956 = vsel %vm1955, %v1947, %v1952
  %v1957 = vrsqrt.pop %v1946
  %v1958 = vmul.f32 %v1957, %v1946
  %v1959 = vmul.f32 %v1958, %v1957
  %v1960 = vmul.f32 0.5, %v1959
  %v1961 = vsub.f32 1.5, %v1960
  %v1962 = vmul.f32 %v1957, %v1961
  %vm1963 = vweird.f32 %v1946
  %vm1964 = vweird.f32 %v1957
  %vm1965 = vmor %vm1963, %vm1964
  %v1966 = vsel %vm1965, %v1957, %v1962
  %v1967 = vmul.f32 %v1933, %v1956
  %v1968 = vmul.f32 %v1934, %v1966
  %v1970 = vperm.slane %v1922, 0
  %v1972 = vmul.f32 %v1967, %v1970
  %v1973 = vmul.f32 %v1968, %v1970
  %v1975 = vperm.slane %v1924, 0
  %v1977 = vadd.f32 %v1972, %v1975
  %v1978 = vadd.f32 %v1973, %v1975
  %v1979 = vpack.c.bf16 %v1977, %v1977
  %v1980 = vpack.c.bf16 %v1978, %v1978
  %v1981 = vld [vmem:[%s20] sm:$0xf]
  %v1982 = vld [vmem:[%s20 + $0x4] sm:$0xf]
  %v1983 = vld [vmem:[%s20 + $0x8] sm:$0xf]
  %v1984 = vld [vmem:[%s20 + $0xc] sm:$0xf]
  %v1985 = vld [vmem:[%s21] sm:$0x1]
  %v1987 = vperm.slane %v1985, 0
  %v1991 = vunpack.c.l.b16 %v1979
  %v1992 = vunpack.c.l.b16 %v1980
  %v1993 = vrot.slane %v1992, 7
  %vm1994 = vcmask 1041409
  %v1995 = vsel %vm1994, %v1993, %v1991
  %v1996 = vpack.c.b16 %v1995, %v1995
  %v2001 = vunpack.c.l.b16 %v1981
  %v2002 = vunpack.c.l.b16 %v1982
  %v2003 = vunpack.c.l.b16 %v1983
  %v2004 = vunpack.c.l.b16 %v1984
  %v2005 = vpack.c.b16 %v2002, %v2001
  %v2006 = vpack.c.b16 %v2004, %v2003
  %v2010 = vsel %vm90, %v1996, 0
  %2012 = vmatpush.bf16.msra.mxu0 0
  %2013 = vmatpush.bf16.msra.mxu0 0
  %2014 = vmatpush.bf16.msra.mxu0 0
  %2015 = vmatpush.bf16.msra.mxu0 0
  %2016 = vmatpush.bf16.msra.mxu0 0
  %2017 = vmatpush.bf16.msra.mxu0 0
  %2018 = vmatpush.bf16.msra.mxu0 %v2006
  %2019 = vmatpush.bf16.msra.mxu0 %v2005
  %2020 = vmatmul.bf16.gmra.mxu0 %v2010
  %v2021 = vpop.f32.mrf.mxu0
  %v2022 = vadd.f32 %v1987, %v2021
  %v2023 = vpop.f32.mrf.mxu0
  %2024 = vdwg.mxu0
  %v2025 = vtanh.pop %v2022
  %v2026 = vld [vmem:[%s22] sm:$0x1]
  %v2028 = vperm.slane %v2026, 0
  %v2030 = vmul.f32 %v2025, %v2028
  %vm2031 = vcmask 254976
  %v2032 = vsel %vm2031, %v2030, 0.0
  %2033 = vadd.xlane.f32.xlu0 %v2032
  %v2034 = vpop.xlane.xlu0 %2033
  %v2035 = vld [vmem:[#allocation2] sm:$0x1]
  %v2037 = vperm.slane %v2035, 0
  %v2039 = vadd.f32 %v2034, %v2037
  %v2040 = vxor.u32 %v2039, 2147483648
  %v2041 = vmul.f32 %v2040, 1.442695
  %v2042 = vpow.pop %v2041
  %v2043 = vadd.f32 %v2042, 1.0
  %v2044 = vrcp.pop %v2043
  %v2045 = vmul.f32 %v2043, %v2044
  %v2046 = vsub.f32 1.0, %v2045
  %v2047 = vmul.f32 %v2044, %v2046
  %v2048 = vadd.f32 %v2044, %v2047
  %vm2049 = vweird.f32 %v2043
  %vm2050 = vweird.f32 %v2044
  %vm2051 = vmor %vm2049, %vm2050
  %v2052 = vsel %vm2051, %v2044, %v2048
  %v2053 = vand.u32 2147483647, %v2043
  %vm2054 = vcmp.eq.f32.partialorder %v2053, 8.507059e+37
  %v2055 = vand.u32 %v2043, 2147483648
  %v2056 = vor.u32 1.1754944e-38, %v2055
  %v2057 = vsel %vm2054, %v2056, %v2052
  %v2058 = vmul.f32 1.0, %v2057
  %vm2059 = vcmask 1024
  %2060 = vst.msk [vmem:[%s24] sm:$0x3] %vm2059, %v2058
  // Predicated region
  $region98: #{subjectivity_bert_forward.1} parent=0 // pred_check
    _
  $region99: #{subjectivity_bert_forward.1} parent=0 // pred_check_branch
    %2062 = sbr.rel (0) target = $region101
  $region100: #{subjectivity_bert_forward.1} parent=0 // pred_region
    _
  $region101: #{subjectivity_bert_forward.1} parent=0 // pred_fallthru
    _
  // Predicated region
  $region102: #{subjectivity_bert_forward.1} parent=0 // pred_check
    _
  $region103: #{subjectivity_bert_forward.1} parent=0 // pred_check_branch
    %2064 = sbr.rel (0) target = $region105
  $region104: #{subjectivity_bert_forward.1} parent=0 // pred_region
    _
  $region105: #{subjectivity_bert_forward.1} parent=0 // pred_fallthru
    _

</llo_original>
